<compile_context>
chip_gen: v7x
topology: tpu7x:2x2x1
jax: 0.10.0
libtpu: 0.0.40
codegen_flags: <defaults>
</compile_context>

<pallas_src>
import functools

import jax
import jax.numpy as jnp
from jax import lax
from jax.experimental import pallas as pl
from jax.experimental.pallas import tpu as pltpu

_H = 8      # hidden width of the MLP
_PACK = 8   # batch rows packed per super-row (8 rows x ni features -> one lane row)


def _linmodel_kernel(x_ref, p_ref, o_ref, *, lpack, hpack, ppack, precision):
    # Packed-parameter slab layout (rows of a [lpack + 2*hpack + 24, hpack] f32 array):
    #   [0, lpack)                    : block-diag W1    [lpack, hpack]
    #   [lpack, lpack+hpack)          : block-diag W2    [hpack, hpack]
    #   [lpack+hpack, lpack+2*hpack)  : block-diag W345  [hpack, ppack]   (cols 0..ppack)
    #   row r0 = lpack + 2*hpack      : tiled b1   [1, hpack]
    #   row r0 + 8                    : tiled b2   [1, hpack]
    #   row r0 + 16                   : tiled b345 [1, ppack]             (cols 0..ppack)
    r0 = lpack + 2 * hpack
    w1 = p_ref[0:lpack, :]
    w2 = p_ref[lpack:lpack + hpack, :]
    w345 = p_ref[lpack + hpack:lpack + 2 * hpack, 0:ppack]
    b1 = p_ref[r0:r0 + 1, :]
    b2 = p_ref[r0 + 8:r0 + 9, :]
    b345 = p_ref[r0 + 16:r0 + 17, 0:ppack]

    x = x_ref[...]                                                     # [bm_sr, lpack]
    h = jnp.dot(x, w1, preferred_element_type=jnp.float32,
                precision=precision) + b1                              # layer_1 (packed)
    h = jnp.maximum(h, 0.0)                                            # relu
    h = jnp.dot(h, w2, preferred_element_type=jnp.float32,
                precision=precision) + b2                              # layer_2 (packed)
    h = jnp.maximum(h, 0.0)                                            # relu
    y = jnp.dot(h, w345, preferred_element_type=jnp.float32,
                precision=precision) + b345                            # layers 3-5 folded
    o_ref[...] = y.astype(o_ref.dtype)                                 # [bm_sr, ppack]


def _pack_params(params, ni):
    """Fold layers 3-5 and expand everything to block-diagonal lane-packed form,
    packed into a single f32 slab (one HBM->VMEM DMA)."""
    (w1, b1), (w2, b2), (w3, b3), (w4, b4), (w5, b5) = params
    hi = lax.Precision.HIGHEST
    w345 = jnp.dot(jnp.dot(w3, w4, precision=hi), w5, precision=hi)             # [8, 1]
    b345 = jnp.dot(jnp.dot(b3, w4, precision=hi) + b4, w5, precision=hi) + b5   # [1, 1]

    L = _PACK * ni        # packed input width  (128 for ni=16)
    H = _PACK * _H        # packed hidden width (64)

    w1_bd = jnp.zeros((L, H), jnp.float32)
    w2_bd = jnp.zeros((H, H), jnp.float32)
    w345_bd = jnp.zeros((H, _PACK), jnp.float32)
    for j in range(_PACK):
        w1_bd = w1_bd.at[j * ni:(j + 1) * ni, j * _H:(j + 1) * _H].set(w1)
        w2_bd = w2_bd.at[j * _H:(j + 1) * _H, j * _H:(j + 1) * _H].set(w2)
        w345_bd = w345_bd.at[j * _H:(j + 1) * _H, j:j + 1].set(w345)

    r0 = L + 2 * H                                   # bias rows start (8-aligned)
    slab = jnp.zeros((r0 + 24, H), jnp.float32)
    slab = slab.at[0:L, :].set(w1_bd)
    slab = slab.at[L:L + H, :].set(w2_bd)
    slab = slab.at[L + H:L + 2 * H, 0:_PACK].set(w345_bd)
    slab = slab.at[r0, :].set(jnp.tile(b1, (1, _PACK))[0])
    slab = slab.at[r0 + 8, :].set(jnp.tile(b2, (1, _PACK))[0])
    slab = slab.at[r0 + 16, 0:_PACK].set(jnp.tile(b345, (1, _PACK))[0])
    return slab


def linmodel_forward(x, params, *, bm_rows=32768, precision=lax.Precision.HIGHEST):
    """x: [B, no_input] float32. params: list of 5 (W[in,out], b[1,out]) f32 pairs."""
    B, ni = x.shape
    L = _PACK * ni
    H = _PACK * _H

    slab = _pack_params(params, ni)
    rows = slab.shape[0]

    # Lane-pack the batch: 8 consecutive rows -> one super-row. The reshape is free
    # (row-major contiguous). Only a tiny (<8 row) pad when B is not a multiple of 8.
    B8 = ((B + _PACK - 1) // _PACK) * _PACK
    if B8 != B:
        x = jnp.pad(x, ((0, B8 - B), (0, 0)))
    n_sr = B8 // _PACK
    x_p = x.reshape(n_sr, L)

    # Batch tile in super-rows: big enough to amortize the ~0.35us per-step cost,
    # small enough that double-buffered x/out blocks + intermediates fit in 32 MiB.
    bm_sr = max(8, (bm_rows // _PACK) // 8 * 8)
    if n_sr <= bm_sr:
        bm_sr = n_sr                           # single full-extent block (always legal)
    grid = pl.cdiv(n_sr, bm_sr)                # ragged last block is masked by Pallas

    kernel = functools.partial(_linmodel_kernel, lpack=L, hpack=H, ppack=_PACK,
                               precision=precision)
    out = pl.pallas_call(
        kernel,
        out_shape=jax.ShapeDtypeStruct((n_sr, _PACK), jnp.float32),
        grid_spec=pltpu.PrefetchScalarGridSpec(
            num_scalar_prefetch=0,
            grid=(grid,),
            in_specs=[
                pl.BlockSpec((bm_sr, L), lambda i: (i, 0)),    # x: streamed per tile
                pl.BlockSpec((rows, H), lambda i: (0, 0)),     # params: VMEM-resident
            ],
            out_specs=pl.BlockSpec((bm_sr, _PACK), lambda i: (i, 0)),
        ),
        compiler_params=pltpu.CompilerParams(
            dimension_semantics=("parallel",),                 # megacore sharding on v7x
            vmem_limit_bytes=32 * 1024 * 1024,                 # covers v5e's 16 MiB default
        ),
    )(x_p, slab)

    out_flat = out.reshape(B8)                 # free (contiguous); undo lane packing
    if B8 != B:
        out_flat = out_flat[:B]
    return out_flat.reshape(B, 1)


def init_params(key, no_input):
    """Deterministic init mirroring nn.Linear's U(-1/sqrt(fan_in), 1/sqrt(fan_in))."""
    dims = [(no_input, 8), (8, 8), (8, 8), (8, 8), (8, 1)]
    params = []
    for fan_in, fan_out in dims:
        key, kw, kb = jax.random.split(key, 3)
        bound = 1.0 / jnp.sqrt(jnp.float32(fan_in))
        W = jax.random.uniform(kw, (fan_in, fan_out), jnp.float32, -bound, bound)
        b = jax.random.uniform(kb, (1, fan_out), jnp.float32, -bound, bound)
        params.append((W, b))
    return params


def reference_forward(x, params, precision=lax.Precision.HIGHEST):
    (w1, b1), (w2, b2), (w3, b3), (w4, b4), (w5, b5) = params
    h = jnp.maximum(jnp.dot(x, w1, precision=precision) + b1, 0.0)
    h = jnp.maximum(jnp.dot(h, w2, precision=precision) + b2, 0.0)
    h = jnp.dot(h, w3, precision=precision) + b3
    h = jnp.dot(h, w4, precision=precision) + b4
    return jnp.dot(h, w5, precision=precision) + b5


if __name__ == "__main__":
    key = jax.random.PRNGKey(0)
    k_p, k_x1, k_x2, k_x3 = jax.random.split(key, 4)

    no_input = 16                      # len(X[0]) in the original script
    params = init_params(k_p, no_input)

    # Small batch: single block, exercises the basic packed path.
    x1 = jax.random.normal(k_x1, (8, no_input), jnp.float32)
    out1 = jax.block_until_ready(linmodel_forward(x1, params))
    ref1 = reference_forward(x1, params)
    assert out1.shape == (8, 1)
    assert jnp.allclose(out1, ref1, atol=2e-5, rtol=1e-5), "mismatch vs. reference (small batch)"

    # Batch not a multiple of 8: exercises the tiny pad + final slice.
    x2 = jax.random.normal(k_x2, (13, no_input), jnp.float32)
    out2 = jax.block_until_ready(linmodel_forward(x2, params))
    ref2 = reference_forward(x2, params)
    assert out2.shape == (13, 1)
    assert jnp.allclose(out2, ref2, atol=2e-5, rtol=1e-5), "mismatch vs. reference (odd batch)"

    # Multi-step grid with a ragged last block (small bm_rows keeps the test tiny).
    x3 = jax.random.normal(k_x3, (520, no_input), jnp.float32)
    out3 = jax.block_until_ready(linmodel_forward(x3, params, bm_rows=128))
    ref3 = reference_forward(x3, params)
    assert out3.shape == (520, 1)
    assert jnp.allclose(out3, ref3, atol=2e-5, rtol=1e-5), "mismatch vs. reference (tiled batch)"

    print("KERNEL_OK")
</pallas_src>

<mosaic_0001>
module attributes {stable_mosaic.version = 11 : i64} {
  func.func @_linmodel_kernel(%arg0: i32, %arg1: memref<1x128xf32, #tpu.memory_space<vmem>>, %arg2: memref<280x64xf32, #tpu.memory_space<vmem>>, %arg3: memref<1x8xf32, #tpu.memory_space<vmem>>) attributes {dimension_semantics = [#tpu.dimension_semantics<parallel>], iteration_bounds = array<i64: 1>, scalar_prefetch = 0 : i64, scratch_operands = 0 : i64, tpu.core_type = #tpu.core_type<tc>, window_params = [{transform_indices = @transform_0, window_bounds = array<i64: 1, 128>}, {pipeline_mode = #tpu.pipeline_mode<synchronous>, transform_indices = @transform_1, window_bounds = array<i64: 280, 64>}, {transform_indices = @transform_2, window_bounds = array<i64: 1, 8>}]} {
    %c0 = arith.constant 0 : index
    %c0_0 = arith.constant 0 : index
    %0 = vector.load %arg2[%c0, %c0_0] : memref<280x64xf32, #tpu.memory_space<vmem>>, vector<128x64xf32>
    %c128 = arith.constant 128 : index
    %c0_1 = arith.constant 0 : index
    %1 = vector.load %arg2[%c128, %c0_1] : memref<280x64xf32, #tpu.memory_space<vmem>>, vector<64x64xf32>
    %c192 = arith.constant 192 : index
    %c0_2 = arith.constant 0 : index
    %2 = vector.load %arg2[%c192, %c0_2] : memref<280x64xf32, #tpu.memory_space<vmem>>, vector<64x8xf32>
    %c256 = arith.constant 256 : index
    %c0_3 = arith.constant 0 : index
    %3 = vector.load %arg2[%c256, %c0_3] : memref<280x64xf32, #tpu.memory_space<vmem>>, vector<1x64xf32>
    %c264 = arith.constant 264 : index
    %c0_4 = arith.constant 0 : index
    %4 = vector.load %arg2[%c264, %c0_4] : memref<280x64xf32, #tpu.memory_space<vmem>>, vector<1x64xf32>
    %c272 = arith.constant 272 : index
    %c0_5 = arith.constant 0 : index
    %5 = vector.load %arg2[%c272, %c0_5] : memref<280x64xf32, #tpu.memory_space<vmem>>, vector<1x8xf32>
    %c0_6 = arith.constant 0 : index
    %c0_7 = arith.constant 0 : index
    %6 = vector.load %arg1[%c0_6, %c0_7] : memref<1x128xf32, #tpu.memory_space<vmem>>, vector<1x128xf32>
    %cst = arith.constant dense<0.000000e+00> : vector<1x64xf32>
    %7 = tpu.matmul %6, %0, %cst {dimension_numbers = #tpu.dot_dimension_numbers<[1], [0], [0], [1], [0, 0, 1, 1], [], []>, precision = #tpu.contract_precision<fp32>} : vector<1x128xf32>, vector<128x64xf32>, vector<1x64xf32> -> vector<1x64xf32>
    %8 = arith.addf %7, %3 : vector<1x64xf32>
    %cst_8 = arith.constant 0.000000e+00 : f32
    %9 = vector.broadcast %cst_8 : f32 to vector<1x64xf32>
    %10 = arith.maximumf %8, %9 : vector<1x64xf32>
    %cst_9 = arith.constant dense<0.000000e+00> : vector<1x64xf32>
    %11 = tpu.matmul %10, %1, %cst_9 {dimension_numbers = #tpu.dot_dimension_numbers<[1], [0], [0], [1], [0, 0, 1, 1], [], []>, precision = #tpu.contract_precision<fp32>} : vector<1x64xf32>, vector<64x64xf32>, vector<1x64xf32> -> vector<1x64xf32>
    %12 = arith.addf %11, %4 : vector<1x64xf32>
    %cst_10 = arith.constant 0.000000e+00 : f32
    %13 = vector.broadcast %cst_10 : f32 to vector<1x64xf32>
    %14 = arith.maximumf %12, %13 : vector<1x64xf32>
    %cst_11 = arith.constant dense<0.000000e+00> : vector<1x8xf32>
    %15 = tpu.matmul %14, %2, %cst_11 {dimension_numbers = #tpu.dot_dimension_numbers<[1], [0], [0], [1], [0, 0, 1, 1], [], []>, precision = #tpu.contract_precision<fp32>} : vector<1x64xf32>, vector<64x8xf32>, vector<1x8xf32> -> vector<1x8xf32>
    %16 = arith.addf %15, %5 : vector<1x8xf32>
    %c0_12 = arith.constant 0 : index
    %c0_13 = arith.constant 0 : index
    %17 = vector.load %arg3[%c0_12, %c0_13] : memref<1x8xf32, #tpu.memory_space<vmem>>, vector<1x8xf32>
    tpu.vector_store %arg3[%c0_12, %c0_13], %16 {strides = array<i32>} : memref<1x8xf32, #tpu.memory_space<vmem>>, vector<1x8xf32>,
    return
  }
  func.func @transform_0(%arg0: i32) -> (i32, i32) {
    %c0_i32 = arith.constant 0 : i32
    %c0_i32_0 = arith.constant 0 : i32
    return %arg0, %c0_i32 : i32, i32
  }
  func.func @transform_1(%arg0: i32) -> (i32, i32) {
    %c0_i32 = arith.constant 0 : i32
    %c0_i32_0 = arith.constant 0 : i32
    %c0_i32_1 = arith.constant 0 : i32
    return %c0_i32, %c0_i32_0 : i32, i32
  }
  func.func @transform_2(%arg0: i32) -> (i32, i32) {
    %c0_i32 = arith.constant 0 : i32
    %c0_i32_0 = arith.constant 0 : i32
    return %arg0, %c0_i32 : i32, i32
  }
}

</mosaic_0001>

<llo_original>
// kernel: tpu_custom_call.1
$region0: #{tpu_custom_call.1}
  #allocation0 [shape = 'u32[]', space=smem, size = 0x4, offset = 0x4, fixed_abs, tag = 'smem constant byte address 0x4 - core index']
  #allocation1 [shape = 'u32[144,128]{1,0:T(1,128)}', space=vmem, size = 0x12000, scoped, tag = 'internal scratch']
  %s0 = inlined_call_operand.vmem [shape: f32[1,128], index: 0, kind: input, shape index: {}]
  %s1 = inlined_call_operand.vmem [shape: f32[280,64], index: 1, kind: input, shape index: {}]
  %s2 = inlined_call_operand.hbm [shape: f32[1,8], index: 2, kind: output, shape index: {}]
  %s3 = sld [smem:[#allocation0]]
  $region18: #{tpu_custom_call.1} parent=0
    _
  %s5 = ssub.s32 1, %s3
  %s6 = scalar_select 0, %s5, %s3
  $region1: #{tpu_custom_call.1} parent=0
    #allocation2 [shape = 'u8[512]{0}', space=vmem, size = 0x400, scoped, tag = 'output window, operand 0, single buffered']
    #allocation3 [shape = 's32[1]{0}', space=sflag, size = 0x4, scoped, tag = 'scoped memory for tpu_custom_call.1']
    %7 = vsyncpa [#allocation3], 0
    // Predicated region
    $region2: #{tpu_custom_call.1} parent=1 // pred_check
      _
    $region3: #{tpu_custom_call.1} parent=1 // pred_check_branch
      %9 = sbr.rel (0) target = $region5
    $region4: #{tpu_custom_call.1} parent=1 // pred_region
      _
    $region5: #{tpu_custom_call.1} parent=1 // pred_fallthru
      _
    // Predicated region
    $region6: #{tpu_custom_call.1} parent=1 // pred_check
      _
    $region7: #{tpu_custom_call.1} parent=1 // pred_check_branch
      %11 = sbr.rel (0) target = $region9
    $region8: #{tpu_custom_call.1} parent=1 // pred_region
      _
    $region9: #{tpu_custom_call.1} parent=1 // pred_fallthru
      _
    %v12 = vld [vmem:[%s1] sm:$0xff]
    %v13 = vld [vmem:[%s1 + $0x8] sm:$0xff]
    %v14 = vld [vmem:[%s1 + $0x10] sm:$0xff]
    %v15 = vld [vmem:[%s1 + $0x18] sm:$0xff]
    %v16 = vld [vmem:[%s1 + $0x20] sm:$0xff]
    %v17 = vld [vmem:[%s1 + $0x28] sm:$0xff]
    %v18 = vld [vmem:[%s1 + $0x30] sm:$0xff]
    %v19 = vld [vmem:[%s1 + $0x38] sm:$0xff]
    %v20 = vld [vmem:[%s1 + $0x40] sm:$0xff]
    %v21 = vld [vmem:[%s1 + $0x48] sm:$0xff]
    %v22 = vld [vmem:[%s1 + $0x50] sm:$0xff]
    %v23 = vld [vmem:[%s1 + $0x58] sm:$0xff]
    %v24 = vld [vmem:[%s1 + $0x60] sm:$0xff]
    %v25 = vld [vmem:[%s1 + $0x68] sm:$0xff]
    %v26 = vld [vmem:[%s1 + $0x70] sm:$0xff]
    %v27 = vld [vmem:[%s1 + $0x78] sm:$0xff]
    %v28 = vld [vmem:[%s1 + $0x80] sm:$0xff]
    %v29 = vld [vmem:[%s1 + $0x88] sm:$0xff]
    %v30 = vld [vmem:[%s1 + $0x90] sm:$0xff]
    %v31 = vld [vmem:[%s1 + $0x98] sm:$0xff]
    %v32 = vld [vmem:[%s1 + $0xa0] sm:$0xff]
    %v33 = vld [vmem:[%s1 + $0xa8] sm:$0xff]
    %v34 = vld [vmem:[%s1 + $0xb0] sm:$0xff]
    %v35 = vld [vmem:[%s1 + $0xb8] sm:$0xff]
    %v36 = vld [vmem:[%s1 + $0xc0] sm:$0xff]
    %v37 = vld [vmem:[%s1 + $0xc8] sm:$0xff]
    %v38 = vld [vmem:[%s1 + $0xd0] sm:$0xff]
    %v39 = vld [vmem:[%s1 + $0xd8] sm:$0xff]
    %v40 = vld [vmem:[%s1 + $0xe0] sm:$0xff]
    %v41 = vld [vmem:[%s1 + $0xe8] sm:$0xff]
    %v42 = vld [vmem:[%s1 + $0xf0] sm:$0xff]
    %v43 = vld [vmem:[%s1 + $0xf8] sm:$0xff]
    %v44 = vld [vmem:[%s1 + $0x100] sm:$0x1]
    %v45 = vld [vmem:[%s1 + $0x108] sm:$0x1]
    %v46 = vld [vmem:[%s1 + $0x110] sm:$0x1]
    %v47 = vld [vmem:[%s0] sm:$0x1]
    %48 = vmatprep.subr.mxu0 0.0
    %v49 = vand.u32 %v12, 4294901760
    %50 = vmatpush1.msra.mxu0 %v49
    %51 = vmatprep.subr.mxu0 0.0
    %v52 = vand.u32 %v13, 4294901760
    %53 = vmatpush1.msra.mxu0 %v52
    %54 = vmatprep.subr.mxu0 0.0
    %v55 = vand.u32 %v14, 4294901760
    %56 = vmatpush1.msra.mxu0 %v55
    %57 = vmatprep.subr.mxu0 0.0
    %v58 = vand.u32 %v15, 4294901760
    %59 = vmatpush1.msra.mxu0 %v58
    %60 = vmatprep.subr.mxu0 0.0
    %v61 = vand.u32 %v16, 4294901760
    %62 = vmatpush1.msra.mxu0 %v61
    %63 = vmatprep.subr.mxu0 0.0
    %v64 = vand.u32 %v17, 4294901760
    %65 = vmatpush1.msra.mxu0 %v64
    %66 = vmatprep.subr.mxu0 0.0
    %v67 = vand.u32 %v18, 4294901760
    %68 = vmatpush1.msra.mxu0 %v67
    %69 = vmatprep.subr.mxu0 0.0
    %v70 = vand.u32 %v19, 4294901760
    %71 = vmatpush1.msra.mxu0 %v70
    %72 = vmatprep.subr.mxu0 0.0
    %v73 = vand.u32 %v20, 4294901760
    %74 = vmatpush1.msra.mxu0 %v73
    %75 = vmatprep.subr.mxu0 0.0
    %v76 = vand.u32 %v21, 4294901760
    %77 = vmatpush1.msra.mxu0 %v76
    %78 = vmatprep.subr.mxu0 0.0
    %v79 = vand.u32 %v22, 4294901760
    %80 = vmatpush1.msra.mxu0 %v79
    %81 = vmatprep.subr.mxu0 0.0
    %v82 = vand.u32 %v23, 4294901760
    %83 = vmatpush1.msra.mxu0 %v82
    %84 = vmatprep.subr.mxu0 0.0
    %v85 = vand.u32 %v24, 4294901760
    %86 = vmatpush1.msra.mxu0 %v85
    %87 = vmatprep.subr.mxu0 0.0
    %v88 = vand.u32 %v25, 4294901760
    %89 = vmatpush1.msra.mxu0 %v88
    %90 = vmatprep.subr.mxu0 0.0
    %v91 = vand.u32 %v26, 4294901760
    %92 = vmatpush1.msra.mxu0 %v91
    %93 = vmatprep.subr.mxu0 0.0
    %v94 = vand.u32 %v27, 4294901760
    %95 = vmatpush1.msra.mxu0 %v94
    %96 = vmatprep.subr.mxu0 0.0
    %97 = vmatpush1.msra.mxu0 0.0
    %98 = vmatprep.subr.mxu0 0.0
    %99 = vmatpush1.msra.mxu0 0.0
    %100 = vmatprep.subr.mxu0 0.0
    %101 = vmatpush1.msra.mxu0 0.0
    %102 = vmatprep.subr.mxu0 0.0
    %103 = vmatpush1.msra.mxu0 0.0
    %104 = vmatprep.subr.mxu0 0.0
    %105 = vmatpush1.msra.mxu0 0.0
    %106 = vmatprep.subr.mxu0 0.0
    %107 = vmatpush1.msra.mxu0 0.0
    %108 = vmatprep.subr.mxu0 0.0
    %109 = vmatpush1.msra.mxu0 0.0
    %110 = vmatprep.subr.mxu0 0.0
    %111 = vmatpush1.msra.mxu0 0.0
    %112 = vmatprep.subr.mxu0 0.0
    %113 = vmatpush1.msra.mxu0 0.0
    %114 = vmatprep.subr.mxu0 0.0
    %115 = vmatpush1.msra.mxu0 0.0
    %116 = vmatprep.subr.mxu0 0.0
    %117 = vmatpush1.msra.mxu0 0.0
    %118 = vmatprep.subr.mxu0 0.0
    %119 = vmatpush1.msra.mxu0 0.0
    %120 = vmatprep.subr.mxu0 0.0
    %121 = vmatpush1.msra.mxu0 0.0
    %122 = vmatprep.subr.mxu0 0.0
    %123 = vmatpush1.msra.mxu0 0.0
    %124 = vmatprep.subr.mxu0 0.0
    %125 = vmatpush1.msra.mxu0 0.0
    %126 = vmatprep.subr.mxu0 0.0
    %127 = vmatpush1.msra.mxu0 0.0
    %128 = vmatprep.mubr.f32.mxu0 0.0
    %v129 = vand.u32 %v47, 4294901760
    %v130 = vsub.f32 %v47, %v129
    %v131 = vand.u32 %v130, 4294901760
    %v132 = vsub.f32 %v130, %v131
    %v133 = vand.u32 %v132, 4294901760
    %134 = vmatmul.mubr.f32.gmra.mrb[0].mxu0 %v133
    %v135 = vpop.f32.mrb[0].mxu0
    %v136 = vadd.f32 %v44, %v135
    %v137 = vpop.f32.mrb[0].mxu0
    %138 = vdwg.mxu0
    %139 = vmatprep.subr.mxu0 0.0
    %v140 = vand.u32 %v12, 4294901760
    %v141 = vsub.f32 %v12, %v140
    %v142 = vand.u32 %v141, 4294901760
    %v143 = vsub.f32 %v141, %v142
    %v144 = vand.u32 %v143, 4294901760
    %145 = vmatpush1.msra.mxu0 %v144
    %146 = vmatprep.subr.mxu0 0.0
    %v147 = vand.u32 %v13, 4294901760
    %v148 = vsub.f32 %v13, %v147
    %v149 = vand.u32 %v148, 4294901760
    %v150 = vsub.f32 %v148, %v149
    %v151 = vand.u32 %v150, 4294901760
    %152 = vmatpush1.msra.mxu0 %v151
    %153 = vmatprep.subr.mxu0 0.0
    %v154 = vand.u32 %v14, 4294901760
    %v155 = vsub.f32 %v14, %v154
    %v156 = vand.u32 %v155, 4294901760
    %v157 = vsub.f32 %v155, %v156
    %v158 = vand.u32 %v157, 4294901760
    %159 = vmatpush1.msra.mxu0 %v158
    %160 = vmatprep.subr.mxu0 0.0
    %v161 = vand.u32 %v15, 4294901760
    %v162 = vsub.f32 %v15, %v161
    %v163 = vand.u32 %v162, 4294901760
    %v164 = vsub.f32 %v162, %v163
    %v165 = vand.u32 %v164, 4294901760
    %166 = vmatpush1.msra.mxu0 %v165
    %167 = vmatprep.subr.mxu0 0.0
    %v168 = vand.u32 %v16, 4294901760
    %v169 = vsub.f32 %v16, %v168
    %v170 = vand.u32 %v169, 4294901760
    %v171 = vsub.f32 %v169, %v170
    %v172 = vand.u32 %v171, 4294901760
    %173 = vmatpush1.msra.mxu0 %v172
    %174 = vmatprep.subr.mxu0 0.0
    %v175 = vand.u32 %v17, 4294901760
    %v176 = vsub.f32 %v17, %v175
    %v177 = vand.u32 %v176, 4294901760
    %v178 = vsub.f32 %v176, %v177
    %v179 = vand.u32 %v178, 4294901760
    %180 = vmatpush1.msra.mxu0 %v179
    %181 = vmatprep.subr.mxu0 0.0
    %v182 = vand.u32 %v18, 4294901760
    %v183 = vsub.f32 %v18, %v182
    %v184 = vand.u32 %v183, 4294901760
    %v185 = vsub.f32 %v183, %v184
    %v186 = vand.u32 %v185, 4294901760
    %187 = vmatpush1.msra.mxu0 %v186
    %188 = vmatprep.subr.mxu0 0.0
    %v189 = vand.u32 %v19, 4294901760
    %v190 = vsub.f32 %v19, %v189
    %v191 = vand.u32 %v190, 4294901760
    %v192 = vsub.f32 %v190, %v191
    %v193 = vand.u32 %v192, 4294901760
    %194 = vmatpush1.msra.mxu0 %v193
    %195 = vmatprep.subr.mxu0 0.0
    %v196 = vand.u32 %v20, 4294901760
    %v197 = vsub.f32 %v20, %v196
    %v198 = vand.u32 %v197, 4294901760
    %v199 = vsub.f32 %v197, %v198
    %v200 = vand.u32 %v199, 4294901760
    %201 = vmatpush1.msra.mxu0 %v200
    %202 = vmatprep.subr.mxu0 0.0
    %v203 = vand.u32 %v21, 4294901760
    %v204 = vsub.f32 %v21, %v203
    %v205 = vand.u32 %v204, 4294901760
    %v206 = vsub.f32 %v204, %v205
    %v207 = vand.u32 %v206, 4294901760
    %208 = vmatpush1.msra.mxu0 %v207
    %209 = vmatprep.subr.mxu0 0.0
    %v210 = vand.u32 %v22, 4294901760
    %v211 = vsub.f32 %v22, %v210
    %v212 = vand.u32 %v211, 4294901760
    %v213 = vsub.f32 %v211, %v212
    %v214 = vand.u32 %v213, 4294901760
    %215 = vmatpush1.msra.mxu0 %v214
    %216 = vmatprep.subr.mxu0 0.0
    %v217 = vand.u32 %v23, 4294901760
    %v218 = vsub.f32 %v23, %v217
    %v219 = vand.u32 %v218, 4294901760
    %v220 = vsub.f32 %v218, %v219
    %v221 = vand.u32 %v220, 4294901760
    %222 = vmatpush1.msra.mxu0 %v221
    %223 = vmatprep.subr.mxu0 0.0
    %v224 = vand.u32 %v24, 4294901760
    %v225 = vsub.f32 %v24, %v224
    %v226 = vand.u32 %v225, 4294901760
    %v227 = vsub.f32 %v225, %v226
    %v228 = vand.u32 %v227, 4294901760
    %229 = vmatpush1.msra.mxu0 %v228
    %230 = vmatprep.subr.mxu0 0.0
    %v231 = vand.u32 %v25, 4294901760
    %v232 = vsub.f32 %v25, %v231
    %v233 = vand.u32 %v232, 4294901760
    %v234 = vsub.f32 %v232, %v233
    %v235 = vand.u32 %v234, 4294901760
    %236 = vmatpush1.msra.mxu0 %v235
    %237 = vmatprep.subr.mxu0 0.0
    %v238 = vand.u32 %v26, 4294901760
    %v239 = vsub.f32 %v26, %v238
    %v240 = vand.u32 %v239, 4294901760
    %v241 = vsub.f32 %v239, %v240
    %v242 = vand.u32 %v241, 4294901760
    %243 = vmatpush1.msra.mxu0 %v242
    %244 = vmatprep.subr.mxu0 0.0
    %v245 = vand.u32 %v27, 4294901760
    %v246 = vsub.f32 %v27, %v245
    %v247 = vand.u32 %v246, 4294901760
    %v248 = vsub.f32 %v246, %v247
    %v249 = vand.u32 %v248, 4294901760
    %250 = vmatpush1.msra.mxu0 %v249
    %251 = vmatprep.subr.mxu0 0.0
    %252 = vmatpush1.msra.mxu0 0.0
    %253 = vmatprep.subr.mxu0 0.0
    %254 = vmatpush1.msra.mxu0 0.0
    %255 = vmatprep.subr.mxu0 0.0
    %256 = vmatpush1.msra.mxu0 0.0
    %257 = vmatprep.subr.mxu0 0.0
    %258 = vmatpush1.msra.mxu0 0.0
    %259 = vmatprep.subr.mxu0 0.0
    %260 = vmatpush1.msra.mxu0 0.0
    %261 = vmatprep.subr.mxu0 0.0
    %262 = vmatpush1.msra.mxu0 0.0
    %263 = vmatprep.subr.mxu0 0.0
    %264 = vmatpush1.msra.mxu0 0.0
    %265 = vmatprep.subr.mxu0 0.0
    %266 = vmatpush1.msra.mxu0 0.0
    %267 = vmatprep.subr.mxu0 0.0
    %268 = vmatpush1.msra.mxu0 0.0
    %269 = vmatprep.subr.mxu0 0.0
    %270 = vmatpush1.msra.mxu0 0.0
    %271 = vmatprep.subr.mxu0 0.0
    %272 = vmatpush1.msra.mxu0 0.0
    %273 = vmatprep.subr.mxu0 0.0
    %274 = vmatpush1.msra.mxu0 0.0
    %275 = vmatprep.subr.mxu0 0.0
    %276 = vmatpush1.msra.mxu0 0.0
    %277 = vmatprep.subr.mxu0 0.0
    %278 = vmatpush1.msra.mxu0 0.0
    %279 = vmatprep.subr.mxu0 0.0
    %280 = vmatpush1.msra.mxu0 0.0
    %281 = vmatprep.subr.mxu0 0.0
    %282 = vmatpush1.msra.mxu0 0.0
    %283 = vmatprep.mubr.f32.mxu0 0.0
    %v284 = vand.u32 %v47, 4294901760
    %285 = vmatmul.mubr.f32.gmra.mrb[0].mxu0 %v284
    %v286 = vpop.f32.mrb[0].mxu0
    %v287 = vadd.f32 %v136, %v286
    %v288 = vpop.f32.mrb[0].mxu0
    %289 = vdwg.mxu0
    %290 = vmatprep.subr.mxu0 0.0
    %v291 = vand.u32 %v12, 4294901760
    %v292 = vsub.f32 %v12, %v291
    %293 = vmatpush1.msra.mxu0 %v292
    %294 = vmatprep.subr.mxu0 0.0
    %v295 = vand.u32 %v13, 4294901760
    %v296 = vsub.f32 %v13, %v295
    %297 = vmatpush1.msra.mxu0 %v296
    %298 = vmatprep.subr.mxu0 0.0
    %v299 = vand.u32 %v14, 4294901760
    %v300 = vsub.f32 %v14, %v299
    %301 = vmatpush1.msra.mxu0 %v300
    %302 = vmatprep.subr.mxu0 0.0
    %v303 = vand.u32 %v15, 4294901760
    %v304 = vsub.f32 %v15, %v303
    %305 = vmatpush1.msra.mxu0 %v304
    %306 = vmatprep.subr.mxu0 0.0
    %v307 = vand.u32 %v16, 4294901760
    %v308 = vsub.f32 %v16, %v307
    %309 = vmatpush1.msra.mxu0 %v308
    %310 = vmatprep.subr.mxu0 0.0
    %v311 = vand.u32 %v17, 4294901760
    %v312 = vsub.f32 %v17, %v311
    %313 = vmatpush1.msra.mxu0 %v312
    %314 = vmatprep.subr.mxu0 0.0
    %v315 = vand.u32 %v18, 4294901760
    %v316 = vsub.f32 %v18, %v315
    %317 = vmatpush1.msra.mxu0 %v316
    %318 = vmatprep.subr.mxu0 0.0
    %v319 = vand.u32 %v19, 4294901760
    %v320 = vsub.f32 %v19, %v319
    %321 = vmatpush1.msra.mxu0 %v320
    %322 = vmatprep.subr.mxu0 0.0
    %v323 = vand.u32 %v20, 4294901760
    %v324 = vsub.f32 %v20, %v323
    %325 = vmatpush1.msra.mxu0 %v324
    %326 = vmatprep.subr.mxu0 0.0
    %v327 = vand.u32 %v21, 4294901760
    %v328 = vsub.f32 %v21, %v327
    %329 = vmatpush1.msra.mxu0 %v328
    %330 = vmatprep.subr.mxu0 0.0
    %v331 = vand.u32 %v22, 4294901760
    %v332 = vsub.f32 %v22, %v331
    %333 = vmatpush1.msra.mxu0 %v332
    %334 = vmatprep.subr.mxu0 0.0
    %v335 = vand.u32 %v23, 4294901760
    %v336 = vsub.f32 %v23, %v335
    %337 = vmatpush1.msra.mxu0 %v336
    %338 = vmatprep.subr.mxu0 0.0
    %v339 = vand.u32 %v24, 4294901760
    %v340 = vsub.f32 %v24, %v339
    %341 = vmatpush1.msra.mxu0 %v340
    %342 = vmatprep.subr.mxu0 0.0
    %v343 = vand.u32 %v25, 4294901760
    %v344 = vsub.f32 %v25, %v343
    %345 = vmatpush1.msra.mxu0 %v344
    %346 = vmatprep.subr.mxu0 0.0
    %v347 = vand.u32 %v26, 4294901760
    %v348 = vsub.f32 %v26, %v347
    %349 = vmatpush1.msra.mxu0 %v348
    %350 = vmatprep.subr.mxu0 0.0
    %v351 = vand.u32 %v27, 4294901760
    %v352 = vsub.f32 %v27, %v351
    %353 = vmatpush1.msra.mxu0 %v352
    %354 = vmatprep.subr.mxu0 0.0
    %355 = vmatpush1.msra.mxu0 0.0
    %356 = vmatprep.subr.mxu0 0.0
    %357 = vmatpush1.msra.mxu0 0.0
    %358 = vmatprep.subr.mxu0 0.0
    %359 = vmatpush1.msra.mxu0 0.0
    %360 = vmatprep.subr.mxu0 0.0
    %361 = vmatpush1.msra.mxu0 0.0
    %362 = vmatprep.subr.mxu0 0.0
    %363 = vmatpush1.msra.mxu0 0.0
    %364 = vmatprep.subr.mxu0 0.0
    %365 = vmatpush1.msra.mxu0 0.0
    %366 = vmatprep.subr.mxu0 0.0
    %367 = vmatpush1.msra.mxu0 0.0
    %368 = vmatprep.subr.mxu0 0.0
    %369 = vmatpush1.msra.mxu0 0.0
    %370 = vmatprep.subr.mxu0 0.0
    %371 = vmatpush1.msra.mxu0 0.0
    %372 = vmatprep.subr.mxu0 0.0
    %373 = vmatpush1.msra.mxu0 0.0
    %374 = vmatprep.subr.mxu0 0.0
    %375 = vmatpush1.msra.mxu0 0.0
    %376 = vmatprep.subr.mxu0 0.0
    %377 = vmatpush1.msra.mxu0 0.0
    %378 = vmatprep.subr.mxu0 0.0
    %379 = vmatpush1.msra.mxu0 0.0
    %380 = vmatprep.subr.mxu0 0.0
    %381 = vmatpush1.msra.mxu0 0.0
    %382 = vmatprep.subr.mxu0 0.0
    %383 = vmatpush1.msra.mxu0 0.0
    %384 = vmatprep.subr.mxu0 0.0
    %385 = vmatpush1.msra.mxu0 0.0
    %386 = vmatprep.mubr.f32.mxu0 0.0
    %v387 = vand.u32 %v47, 4294901760
    %v388 = vsub.f32 %v47, %v387
    %389 = vmatmul.mubr.f32.gmra.mrb[0].mxu0 %v388
    %v390 = vpop.f32.mrb[0].mxu0
    %v391 = vadd.f32 %v287, %v390
    %v392 = vpop.f32.mrb[0].mxu0
    %393 = vdwg.mxu0
    %394 = vmatprep.subr.mxu0 0.0
    %v395 = vand.u32 %v12, 4294901760
    %396 = vmatpush1.msra.mxu0 %v395
    %397 = vmatprep.subr.mxu0 0.0
    %v398 = vand.u32 %v13, 4294901760
    %399 = vmatpush1.msra.mxu0 %v398
    %400 = vmatprep.subr.mxu0 0.0
    %v401 = vand.u32 %v14, 4294901760
    %402 = vmatpush1.msra.mxu0 %v401
    %403 = vmatprep.subr.mxu0 0.0
    %v404 = vand.u32 %v15, 4294901760
    %405 = vmatpush1.msra.mxu0 %v404
    %406 = vmatprep.subr.mxu0 0.0
    %v407 = vand.u32 %v16, 4294901760
    %408 = vmatpush1.msra.mxu0 %v407
    %409 = vmatprep.subr.mxu0 0.0
    %v410 = vand.u32 %v17, 4294901760
    %411 = vmatpush1.msra.mxu0 %v410
    %412 = vmatprep.subr.mxu0 0.0
    %v413 = vand.u32 %v18, 4294901760
    %414 = vmatpush1.msra.mxu0 %v413
    %415 = vmatprep.subr.mxu0 0.0
    %v416 = vand.u32 %v19, 4294901760
    %417 = vmatpush1.msra.mxu0 %v416
    %418 = vmatprep.subr.mxu0 0.0
    %v419 = vand.u32 %v20, 4294901760
    %420 = vmatpush1.msra.mxu0 %v419
    %421 = vmatprep.subr.mxu0 0.0
    %v422 = vand.u32 %v21, 4294901760
    %423 = vmatpush1.msra.mxu0 %v422
    %424 = vmatprep.subr.mxu0 0.0
    %v425 = vand.u32 %v22, 4294901760
    %426 = vmatpush1.msra.mxu0 %v425
    %427 = vmatprep.subr.mxu0 0.0
    %v428 = vand.u32 %v23, 4294901760
    %429 = vmatpush1.msra.mxu0 %v428
    %430 = vmatprep.subr.mxu0 0.0
    %v431 = vand.u32 %v24, 4294901760
    %432 = vmatpush1.msra.mxu0 %v431
    %433 = vmatprep.subr.mxu0 0.0
    %v434 = vand.u32 %v25, 4294901760
    %435 = vmatpush1.msra.mxu0 %v434
    %436 = vmatprep.subr.mxu0 0.0
    %v437 = vand.u32 %v26, 4294901760
    %438 = vmatpush1.msra.mxu0 %v437
    %439 = vmatprep.subr.mxu0 0.0
    %v440 = vand.u32 %v27, 4294901760
    %441 = vmatpush1.msra.mxu0 %v440
    %442 = vmatprep.subr.mxu0 0.0
    %443 = vmatpush1.msra.mxu0 0.0
    %444 = vmatprep.subr.mxu0 0.0
    %445 = vmatpush1.msra.mxu0 0.0
    %446 = vmatprep.subr.mxu0 0.0
    %447 = vmatpush1.msra.mxu0 0.0
    %448 = vmatprep.subr.mxu0 0.0
    %449 = vmatpush1.msra.mxu0 0.0
    %450 = vmatprep.subr.mxu0 0.0
    %451 = vmatpush1.msra.mxu0 0.0
    %452 = vmatprep.subr.mxu0 0.0
    %453 = vmatpush1.msra.mxu0 0.0
    %454 = vmatprep.subr.mxu0 0.0
    %455 = vmatpush1.msra.mxu0 0.0
    %456 = vmatprep.subr.mxu0 0.0
    %457 = vmatpush1.msra.mxu0 0.0
    %458 = vmatprep.subr.mxu0 0.0
    %459 = vmatpush1.msra.mxu0 0.0
    %460 = vmatprep.subr.mxu0 0.0
    %461 = vmatpush1.msra.mxu0 0.0
    %462 = vmatprep.subr.mxu0 0.0
    %463 = vmatpush1.msra.mxu0 0.0
    %464 = vmatprep.subr.mxu0 0.0
    %465 = vmatpush1.msra.mxu0 0.0
    %466 = vmatprep.subr.mxu0 0.0
    %467 = vmatpush1.msra.mxu0 0.0
    %468 = vmatprep.subr.mxu0 0.0
    %469 = vmatpush1.msra.mxu0 0.0
    %470 = vmatprep.subr.mxu0 0.0
    %471 = vmatpush1.msra.mxu0 0.0
    %472 = vmatprep.subr.mxu0 0.0
    %473 = vmatpush1.msra.mxu0 0.0
    %474 = vmatprep.mubr.f32.mxu0 0.0
    %v475 = vand.u32 %v47, 4294901760
    %v476 = vsub.f32 %v47, %v475
    %v477 = vand.u32 %v476, 4294901760
    %478 = vmatmul.mubr.f32.gmra.mrb[0].mxu0 %v477
    %v479 = vpop.f32.mrb[0].mxu0
    %v480 = vadd.f32 %v391, %v479
    %v481 = vpop.f32.mrb[0].mxu0
    %482 = vdwg.mxu0
    %483 = vmatprep.subr.mxu0 0.0
    %v484 = vand.u32 %v12, 4294901760
    %v485 = vsub.f32 %v12, %v484
    %v486 = vand.u32 %v485, 4294901760
    %487 = vmatpush1.msra.mxu0 %v486
    %488 = vmatprep.subr.mxu0 0.0
    %v489 = vand.u32 %v13, 4294901760
    %v490 = vsub.f32 %v13, %v489
    %v491 = vand.u32 %v490, 4294901760
    %492 = vmatpush1.msra.mxu0 %v491
    %493 = vmatprep.subr.mxu0 0.0
    %v494 = vand.u32 %v14, 4294901760
    %v495 = vsub.f32 %v14, %v494
    %v496 = vand.u32 %v495, 4294901760
    %497 = vmatpush1.msra.mxu0 %v496
    %498 = vmatprep.subr.mxu0 0.0
    %v499 = vand.u32 %v15, 4294901760
    %v500 = vsub.f32 %v15, %v499
    %v501 = vand.u32 %v500, 4294901760
    %502 = vmatpush1.msra.mxu0 %v501
    %503 = vmatprep.subr.mxu0 0.0
    %v504 = vand.u32 %v16, 4294901760
    %v505 = vsub.f32 %v16, %v504
    %v506 = vand.u32 %v505, 4294901760
    %507 = vmatpush1.msra.mxu0 %v506
    %508 = vmatprep.subr.mxu0 0.0
    %v509 = vand.u32 %v17, 4294901760
    %v510 = vsub.f32 %v17, %v509
    %v511 = vand.u32 %v510, 4294901760
    %512 = vmatpush1.msra.mxu0 %v511
    %513 = vmatprep.subr.mxu0 0.0
    %v514 = vand.u32 %v18, 4294901760
    %v515 = vsub.f32 %v18, %v514
    %v516 = vand.u32 %v515, 4294901760
    %517 = vmatpush1.msra.mxu0 %v516
    %518 = vmatprep.subr.mxu0 0.0
    %v519 = vand.u32 %v19, 4294901760
    %v520 = vsub.f32 %v19, %v519
    %v521 = vand.u32 %v520, 4294901760
    %522 = vmatpush1.msra.mxu0 %v521
    %523 = vmatprep.subr.mxu0 0.0
    %v524 = vand.u32 %v20, 4294901760
    %v525 = vsub.f32 %v20, %v524
    %v526 = vand.u32 %v525, 4294901760
    %527 = vmatpush1.msra.mxu0 %v526
    %528 = vmatprep.subr.mxu0 0.0
    %v529 = vand.u32 %v21, 4294901760
    %v530 = vsub.f32 %v21, %v529
    %v531 = vand.u32 %v530, 4294901760
    %532 = vmatpush1.msra.mxu0 %v531
    %533 = vmatprep.subr.mxu0 0.0
    %v534 = vand.u32 %v22, 4294901760
    %v535 = vsub.f32 %v22, %v534
    %v536 = vand.u32 %v535, 4294901760
    %537 = vmatpush1.msra.mxu0 %v536
    %538 = vmatprep.subr.mxu0 0.0
    %v539 = vand.u32 %v23, 4294901760
    %v540 = vsub.f32 %v23, %v539
    %v541 = vand.u32 %v540, 4294901760
    %542 = vmatpush1.msra.mxu0 %v541
    %543 = vmatprep.subr.mxu0 0.0
    %v544 = vand.u32 %v24, 4294901760
    %v545 = vsub.f32 %v24, %v544
    %v546 = vand.u32 %v545, 4294901760
    %547 = vmatpush1.msra.mxu0 %v546
    %548 = vmatprep.subr.mxu0 0.0
    %v549 = vand.u32 %v25, 4294901760
    %v550 = vsub.f32 %v25, %v549
    %v551 = vand.u32 %v550, 4294901760
    %552 = vmatpush1.msra.mxu0 %v551
    %553 = vmatprep.subr.mxu0 0.0
    %v554 = vand.u32 %v26, 4294901760
    %v555 = vsub.f32 %v26, %v554
    %v556 = vand.u32 %v555, 4294901760
    %557 = vmatpush1.msra.mxu0 %v556
    %558 = vmatprep.subr.mxu0 0.0
    %v559 = vand.u32 %v27, 4294901760
    %v560 = vsub.f32 %v27, %v559
    %v561 = vand.u32 %v560, 4294901760
    %562 = vmatpush1.msra.mxu0 %v561
    %563 = vmatprep.subr.mxu0 0.0
    %564 = vmatpush1.msra.mxu0 0.0
    %565 = vmatprep.subr.mxu0 0.0
    %566 = vmatpush1.msra.mxu0 0.0
    %567 = vmatprep.subr.mxu0 0.0
    %568 = vmatpush1.msra.mxu0 0.0
    %569 = vmatprep.subr.mxu0 0.0
    %570 = vmatpush1.msra.mxu0 0.0
    %571 = vmatprep.subr.mxu0 0.0
    %572 = vmatpush1.msra.mxu0 0.0
    %573 = vmatprep.subr.mxu0 0.0
    %574 = vmatpush1.msra.mxu0 0.0
    %575 = vmatprep.subr.mxu0 0.0
    %576 = vmatpush1.msra.mxu0 0.0
    %577 = vmatprep.subr.mxu0 0.0
    %578 = vmatpush1.msra.mxu0 0.0
    %579 = vmatprep.subr.mxu0 0.0
    %580 = vmatpush1.msra.mxu0 0.0
    %581 = vmatprep.subr.mxu0 0.0
    %582 = vmatpush1.msra.mxu0 0.0
    %583 = vmatprep.subr.mxu0 0.0
    %584 = vmatpush1.msra.mxu0 0.0
    %585 = vmatprep.subr.mxu0 0.0
    %586 = vmatpush1.msra.mxu0 0.0
    %587 = vmatprep.subr.mxu0 0.0
    %588 = vmatpush1.msra.mxu0 0.0
    %589 = vmatprep.subr.mxu0 0.0
    %590 = vmatpush1.msra.mxu0 0.0
    %591 = vmatprep.subr.mxu0 0.0
    %592 = vmatpush1.msra.mxu0 0.0
    %593 = vmatprep.subr.mxu0 0.0
    %594 = vmatpush1.msra.mxu0 0.0
    %595 = vmatprep.mubr.f32.mxu0 0.0
    %v596 = vand.u32 %v47, 4294901760
    %597 = vmatmul.mubr.f32.gmra.mrb[0].mxu0 %v596
    %v598 = vpop.f32.mrb[0].mxu0
    %v599 = vadd.f32 %v480, %v598
    %v600 = vpop.f32.mrb[0].mxu0
    %601 = vdwg.mxu0
    %602 = vmatprep.subr.mxu0 0.0
    %v603 = vand.u32 %v12, 4294901760
    %604 = vmatpush1.msra.mxu0 %v603
    %605 = vmatprep.subr.mxu0 0.0
    %v606 = vand.u32 %v13, 4294901760
    %607 = vmatpush1.msra.mxu0 %v606
    %608 = vmatprep.subr.mxu0 0.0
    %v609 = vand.u32 %v14, 4294901760
    %610 = vmatpush1.msra.mxu0 %v609
    %611 = vmatprep.subr.mxu0 0.0
    %v612 = vand.u32 %v15, 4294901760
    %613 = vmatpush1.msra.mxu0 %v612
    %614 = vmatprep.subr.mxu0 0.0
    %v615 = vand.u32 %v16, 4294901760
    %616 = vmatpush1.msra.mxu0 %v615
    %617 = vmatprep.subr.mxu0 0.0
    %v618 = vand.u32 %v17, 4294901760
    %619 = vmatpush1.msra.mxu0 %v618
    %620 = vmatprep.subr.mxu0 0.0
    %v621 = vand.u32 %v18, 4294901760
    %622 = vmatpush1.msra.mxu0 %v621
    %623 = vmatprep.subr.mxu0 0.0
    %v624 = vand.u32 %v19, 4294901760
    %625 = vmatpush1.msra.mxu0 %v624
    %626 = vmatprep.subr.mxu0 0.0
    %v627 = vand.u32 %v20, 4294901760
    %628 = vmatpush1.msra.mxu0 %v627
    %629 = vmatprep.subr.mxu0 0.0
    %v630 = vand.u32 %v21, 4294901760
    %631 = vmatpush1.msra.mxu0 %v630
    %632 = vmatprep.subr.mxu0 0.0
    %v633 = vand.u32 %v22, 4294901760
    %634 = vmatpush1.msra.mxu0 %v633
    %635 = vmatprep.subr.mxu0 0.0
    %v636 = vand.u32 %v23, 4294901760
    %637 = vmatpush1.msra.mxu0 %v636
    %638 = vmatprep.subr.mxu0 0.0
    %v639 = vand.u32 %v24, 4294901760
    %640 = vmatpush1.msra.mxu0 %v639
    %641 = vmatprep.subr.mxu0 0.0
    %v642 = vand.u32 %v25, 4294901760
    %643 = vmatpush1.msra.mxu0 %v642
    %644 = vmatprep.subr.mxu0 0.0
    %v645 = vand.u32 %v26, 4294901760
    %646 = vmatpush1.msra.mxu0 %v645
    %647 = vmatprep.subr.mxu0 0.0
    %v648 = vand.u32 %v27, 4294901760
    %649 = vmatpush1.msra.mxu0 %v648
    %650 = vmatprep.subr.mxu0 0.0
    %651 = vmatpush1.msra.mxu0 0.0
    %652 = vmatprep.subr.mxu0 0.0
    %653 = vmatpush1.msra.mxu0 0.0
    %654 = vmatprep.subr.mxu0 0.0
    %655 = vmatpush1.msra.mxu0 0.0
    %656 = vmatprep.subr.mxu0 0.0
    %657 = vmatpush1.msra.mxu0 0.0
    %658 = vmatprep.subr.mxu0 0.0
    %659 = vmatpush1.msra.mxu0 0.0
    %660 = vmatprep.subr.mxu0 0.0
    %661 = vmatpush1.msra.mxu0 0.0
    %662 = vmatprep.subr.mxu0 0.0
    %663 = vmatpush1.msra.mxu0 0.0
    %664 = vmatprep.subr.mxu0 0.0
    %665 = vmatpush1.msra.mxu0 0.0
    %666 = vmatprep.subr.mxu0 0.0
    %667 = vmatpush1.msra.mxu0 0.0
    %668 = vmatprep.subr.mxu0 0.0
    %669 = vmatpush1.msra.mxu0 0.0
    %670 = vmatprep.subr.mxu0 0.0
    %671 = vmatpush1.msra.mxu0 0.0
    %672 = vmatprep.subr.mxu0 0.0
    %673 = vmatpush1.msra.mxu0 0.0
    %674 = vmatprep.subr.mxu0 0.0
    %675 = vmatpush1.msra.mxu0 0.0
    %676 = vmatprep.subr.mxu0 0.0
    %677 = vmatpush1.msra.mxu0 0.0
    %678 = vmatprep.subr.mxu0 0.0
    %679 = vmatpush1.msra.mxu0 0.0
    %680 = vmatprep.subr.mxu0 0.0
    %681 = vmatpush1.msra.mxu0 0.0
    %682 = vmatprep.mubr.f32.mxu0 0.0
    %v683 = vand.u32 %v47, 4294901760
    %684 = vmatmul.mubr.f32.gmra.mrb[0].mxu0 %v683
    %v685 = vpop.f32.mrb[0].mxu0
    %v686 = vadd.f32 %v599, %v685
    %v687 = vpop.f32.mrb[0].mxu0
    %688 = vdwg.mxu0
    %v689 = vmax.f32 %v686, 0.0
    %vm690 = vcmask 523264
    %v692 = vsel %vm690, %v689, 0
    %694 = vmatprep.subr.mxu0 0.0
    %v695 = vand.u32 %v28, 4294901760
    %696 = vmatpush1.msra.mxu0 %v695
    %697 = vmatprep.subr.mxu0 0.0
    %v698 = vand.u32 %v29, 4294901760
    %699 = vmatpush1.msra.mxu0 %v698
    %700 = vmatprep.subr.mxu0 0.0
    %v701 = vand.u32 %v30, 4294901760
    %702 = vmatpush1.msra.mxu0 %v701
    %703 = vmatprep.subr.mxu0 0.0
    %v704 = vand.u32 %v31, 4294901760
    %705 = vmatpush1.msra.mxu0 %v704
    %706 = vmatprep.subr.mxu0 0.0
    %v707 = vand.u32 %v32, 4294901760
    %708 = vmatpush1.msra.mxu0 %v707
    %709 = vmatprep.subr.mxu0 0.0
    %v710 = vand.u32 %v33, 4294901760
    %711 = vmatpush1.msra.mxu0 %v710
    %712 = vmatprep.subr.mxu0 0.0
    %v713 = vand.u32 %v34, 4294901760
    %714 = vmatpush1.msra.mxu0 %v713
    %715 = vmatprep.subr.mxu0 0.0
    %v716 = vand.u32 %v35, 4294901760
    %717 = vmatpush1.msra.mxu0 %v716
    %718 = vmatprep.subr.mxu0 0.0
    %719 = vmatpush1.msra.mxu0 0.0
    %720 = vmatprep.subr.mxu0 0.0
    %721 = vmatpush1.msra.mxu0 0.0
    %722 = vmatprep.subr.mxu0 0.0
    %723 = vmatpush1.msra.mxu0 0.0
    %724 = vmatprep.subr.mxu0 0.0
    %725 = vmatpush1.msra.mxu0 0.0
    %726 = vmatprep.subr.mxu0 0.0
    %727 = vmatpush1.msra.mxu0 0.0
    %728 = vmatprep.subr.mxu0 0.0
    %729 = vmatpush1.msra.mxu0 0.0
    %730 = vmatprep.subr.mxu0 0.0
    %731 = vmatpush1.msra.mxu0 0.0
    %732 = vmatprep.subr.mxu0 0.0
    %733 = vmatpush1.msra.mxu0 0.0
    %734 = vmatprep.subr.mxu0 0.0
    %735 = vmatpush1.msra.mxu0 0.0
    %736 = vmatprep.subr.mxu0 0.0
    %737 = vmatpush1.msra.mxu0 0.0
    %738 = vmatprep.subr.mxu0 0.0
    %739 = vmatpush1.msra.mxu0 0.0
    %740 = vmatprep.subr.mxu0 0.0
    %741 = vmatpush1.msra.mxu0 0.0
    %742 = vmatprep.subr.mxu0 0.0
    %743 = vmatpush1.msra.mxu0 0.0
    %744 = vmatprep.subr.mxu0 0.0
    %745 = vmatpush1.msra.mxu0 0.0
    %746 = vmatprep.subr.mxu0 0.0
    %747 = vmatpush1.msra.mxu0 0.0
    %748 = vmatprep.subr.mxu0 0.0
    %749 = vmatpush1.msra.mxu0 0.0
    %750 = vmatprep.subr.mxu0 0.0
    %751 = vmatpush1.msra.mxu0 0.0
    %752 = vmatprep.subr.mxu0 0.0
    %753 = vmatpush1.msra.mxu0 0.0
    %754 = vmatprep.subr.mxu0 0.0
    %755 = vmatpush1.msra.mxu0 0.0
    %756 = vmatprep.subr.mxu0 0.0
    %757 = vmatpush1.msra.mxu0 0.0
    %758 = vmatprep.subr.mxu0 0.0
    %759 = vmatpush1.msra.mxu0 0.0
    %760 = vmatprep.subr.mxu0 0.0
    %761 = vmatpush1.msra.mxu0 0.0
    %762 = vmatprep.subr.mxu0 0.0
    %763 = vmatpush1.msra.mxu0 0.0
    %764 = vmatprep.subr.mxu0 0.0
    %765 = vmatpush1.msra.mxu0 0.0
    %766 = vmatprep.mubr.f32.mxu0 0.0
    %v767 = vand.u32 %v692, 4294901760
    %v768 = vsub.f32 %v692, %v767
    %v769 = vand.u32 %v768, 4294901760
    %v770 = vsub.f32 %v768, %v769
    %v771 = vand.u32 %v770, 4294901760
    %772 = vmatmul.mubr.f32.gmra.mrb[0].mxu0 %v771
    %v773 = vpop.f32.mrb[0].mxu0
    %v774 = vadd.f32 %v45, %v773
    %v775 = vpop.f32.mrb[0].mxu0
    %776 = vdwg.mxu0
    %777 = vmatprep.subr.mxu0 0.0
    %v778 = vand.u32 %v28, 4294901760
    %v779 = vsub.f32 %v28, %v778
    %v780 = vand.u32 %v779, 4294901760
    %v781 = vsub.f32 %v779, %v780
    %v782 = vand.u32 %v781, 4294901760
    %783 = vmatpush1.msra.mxu0 %v782
    %784 = vmatprep.subr.mxu0 0.0
    %v785 = vand.u32 %v29, 4294901760
    %v786 = vsub.f32 %v29, %v785
    %v787 = vand.u32 %v786, 4294901760
    %v788 = vsub.f32 %v786, %v787
    %v789 = vand.u32 %v788, 4294901760
    %790 = vmatpush1.msra.mxu0 %v789
    %791 = vmatprep.subr.mxu0 0.0
    %v792 = vand.u32 %v30, 4294901760
    %v793 = vsub.f32 %v30, %v792
    %v794 = vand.u32 %v793, 4294901760
    %v795 = vsub.f32 %v793, %v794
    %v796 = vand.u32 %v795, 4294901760
    %797 = vmatpush1.msra.mxu0 %v796
    %798 = vmatprep.subr.mxu0 0.0
    %v799 = vand.u32 %v31, 4294901760
    %v800 = vsub.f32 %v31, %v799
    %v801 = vand.u32 %v800, 4294901760
    %v802 = vsub.f32 %v800, %v801
    %v803 = vand.u32 %v802, 4294901760
    %804 = vmatpush1.msra.mxu0 %v803
    %805 = vmatprep.subr.mxu0 0.0
    %v806 = vand.u32 %v32, 4294901760
    %v807 = vsub.f32 %v32, %v806
    %v808 = vand.u32 %v807, 4294901760
    %v809 = vsub.f32 %v807, %v808
    %v810 = vand.u32 %v809, 4294901760
    %811 = vmatpush1.msra.mxu0 %v810
    %812 = vmatprep.subr.mxu0 0.0
    %v813 = vand.u32 %v33, 4294901760
    %v814 = vsub.f32 %v33, %v813
    %v815 = vand.u32 %v814, 4294901760
    %v816 = vsub.f32 %v814, %v815
    %v817 = vand.u32 %v816, 4294901760
    %818 = vmatpush1.msra.mxu0 %v817
    %819 = vmatprep.subr.mxu0 0.0
    %v820 = vand.u32 %v34, 4294901760
    %v821 = vsub.f32 %v34, %v820
    %v822 = vand.u32 %v821, 4294901760
    %v823 = vsub.f32 %v821, %v822
    %v824 = vand.u32 %v823, 4294901760
    %825 = vmatpush1.msra.mxu0 %v824
    %826 = vmatprep.subr.mxu0 0.0
    %v827 = vand.u32 %v35, 4294901760
    %v828 = vsub.f32 %v35, %v827
    %v829 = vand.u32 %v828, 4294901760
    %v830 = vsub.f32 %v828, %v829
    %v831 = vand.u32 %v830, 4294901760
    %832 = vmatpush1.msra.mxu0 %v831
    %833 = vmatprep.subr.mxu0 0.0
    %834 = vmatpush1.msra.mxu0 0.0
    %835 = vmatprep.subr.mxu0 0.0
    %836 = vmatpush1.msra.mxu0 0.0
    %837 = vmatprep.subr.mxu0 0.0
    %838 = vmatpush1.msra.mxu0 0.0
    %839 = vmatprep.subr.mxu0 0.0
    %840 = vmatpush1.msra.mxu0 0.0
    %841 = vmatprep.subr.mxu0 0.0
    %842 = vmatpush1.msra.mxu0 0.0
    %843 = vmatprep.subr.mxu0 0.0
    %844 = vmatpush1.msra.mxu0 0.0
    %845 = vmatprep.subr.mxu0 0.0
    %846 = vmatpush1.msra.mxu0 0.0
    %847 = vmatprep.subr.mxu0 0.0
    %848 = vmatpush1.msra.mxu0 0.0
    %849 = vmatprep.subr.mxu0 0.0
    %850 = vmatpush1.msra.mxu0 0.0
    %851 = vmatprep.subr.mxu0 0.0
    %852 = vmatpush1.msra.mxu0 0.0
    %853 = vmatprep.subr.mxu0 0.0
    %854 = vmatpush1.msra.mxu0 0.0
    %855 = vmatprep.subr.mxu0 0.0
    %856 = vmatpush1.msra.mxu0 0.0
    %857 = vmatprep.subr.mxu0 0.0
    %858 = vmatpush1.msra.mxu0 0.0
    %859 = vmatprep.subr.mxu0 0.0
    %860 = vmatpush1.msra.mxu0 0.0
    %861 = vmatprep.subr.mxu0 0.0
    %862 = vmatpush1.msra.mxu0 0.0
    %863 = vmatprep.subr.mxu0 0.0
    %864 = vmatpush1.msra.mxu0 0.0
    %865 = vmatprep.subr.mxu0 0.0
    %866 = vmatpush1.msra.mxu0 0.0
    %867 = vmatprep.subr.mxu0 0.0
    %868 = vmatpush1.msra.mxu0 0.0
    %869 = vmatprep.subr.mxu0 0.0
    %870 = vmatpush1.msra.mxu0 0.0
    %871 = vmatprep.subr.mxu0 0.0
    %872 = vmatpush1.msra.mxu0 0.0
    %873 = vmatprep.subr.mxu0 0.0
    %874 = vmatpush1.msra.mxu0 0.0
    %875 = vmatprep.subr.mxu0 0.0
    %876 = vmatpush1.msra.mxu0 0.0
    %877 = vmatprep.subr.mxu0 0.0
    %878 = vmatpush1.msra.mxu0 0.0
    %879 = vmatprep.subr.mxu0 0.0
    %880 = vmatpush1.msra.mxu0 0.0
    %881 = vmatprep.mubr.f32.mxu0 0.0
    %v882 = vand.u32 %v692, 4294901760
    %883 = vmatmul.mubr.f32.gmra.mrb[0].mxu0 %v882
    %v884 = vpop.f32.mrb[0].mxu0
    %v885 = vadd.f32 %v774, %v884
    %v886 = vpop.f32.mrb[0].mxu0
    %887 = vdwg.mxu0
    %888 = vmatprep.subr.mxu0 0.0
    %v889 = vand.u32 %v28, 4294901760
    %v890 = vsub.f32 %v28, %v889
    %891 = vmatpush1.msra.mxu0 %v890
    %892 = vmatprep.subr.mxu0 0.0
    %v893 = vand.u32 %v29, 4294901760
    %v894 = vsub.f32 %v29, %v893
    %895 = vmatpush1.msra.mxu0 %v894
    %896 = vmatprep.subr.mxu0 0.0
    %v897 = vand.u32 %v30, 4294901760
    %v898 = vsub.f32 %v30, %v897
    %899 = vmatpush1.msra.mxu0 %v898
    %900 = vmatprep.subr.mxu0 0.0
    %v901 = vand.u32 %v31, 4294901760
    %v902 = vsub.f32 %v31, %v901
    %903 = vmatpush1.msra.mxu0 %v902
    %904 = vmatprep.subr.mxu0 0.0
    %v905 = vand.u32 %v32, 4294901760
    %v906 = vsub.f32 %v32, %v905
    %907 = vmatpush1.msra.mxu0 %v906
    %908 = vmatprep.subr.mxu0 0.0
    %v909 = vand.u32 %v33, 4294901760
    %v910 = vsub.f32 %v33, %v909
    %911 = vmatpush1.msra.mxu0 %v910
    %912 = vmatprep.subr.mxu0 0.0
    %v913 = vand.u32 %v34, 4294901760
    %v914 = vsub.f32 %v34, %v913
    %915 = vmatpush1.msra.mxu0 %v914
    %916 = vmatprep.subr.mxu0 0.0
    %v917 = vand.u32 %v35, 4294901760
    %v918 = vsub.f32 %v35, %v917
    %919 = vmatpush1.msra.mxu0 %v918
    %920 = vmatprep.subr.mxu0 0.0
    %921 = vmatpush1.msra.mxu0 0.0
    %922 = vmatprep.subr.mxu0 0.0
    %923 = vmatpush1.msra.mxu0 0.0
    %924 = vmatprep.subr.mxu0 0.0
    %925 = vmatpush1.msra.mxu0 0.0
    %926 = vmatprep.subr.mxu0 0.0
    %927 = vmatpush1.msra.mxu0 0.0
    %928 = vmatprep.subr.mxu0 0.0
    %929 = vmatpush1.msra.mxu0 0.0
    %930 = vmatprep.subr.mxu0 0.0
    %931 = vmatpush1.msra.mxu0 0.0
    %932 = vmatprep.subr.mxu0 0.0
    %933 = vmatpush1.msra.mxu0 0.0
    %934 = vmatprep.subr.mxu0 0.0
    %935 = vmatpush1.msra.mxu0 0.0
    %936 = vmatprep.subr.mxu0 0.0
    %937 = vmatpush1.msra.mxu0 0.0
    %938 = vmatprep.subr.mxu0 0.0
    %939 = vmatpush1.msra.mxu0 0.0
    %940 = vmatprep.subr.mxu0 0.0
    %941 = vmatpush1.msra.mxu0 0.0
    %942 = vmatprep.subr.mxu0 0.0
    %943 = vmatpush1.msra.mxu0 0.0
    %944 = vmatprep.subr.mxu0 0.0
    %945 = vmatpush1.msra.mxu0 0.0
    %946 = vmatprep.subr.mxu0 0.0
    %947 = vmatpush1.msra.mxu0 0.0
    %948 = vmatprep.subr.mxu0 0.0
    %949 = vmatpush1.msra.mxu0 0.0
    %950 = vmatprep.subr.mxu0 0.0
    %951 = vmatpush1.msra.mxu0 0.0
    %952 = vmatprep.subr.mxu0 0.0
    %953 = vmatpush1.msra.mxu0 0.0
    %954 = vmatprep.subr.mxu0 0.0
    %955 = vmatpush1.msra.mxu0 0.0
    %956 = vmatprep.subr.mxu0 0.0
    %957 = vmatpush1.msra.mxu0 0.0
    %958 = vmatprep.subr.mxu0 0.0
    %959 = vmatpush1.msra.mxu0 0.0
    %960 = vmatprep.subr.mxu0 0.0
    %961 = vmatpush1.msra.mxu0 0.0
    %962 = vmatprep.subr.mxu0 0.0
    %963 = vmatpush1.msra.mxu0 0.0
    %964 = vmatprep.subr.mxu0 0.0
    %965 = vmatpush1.msra.mxu0 0.0
    %966 = vmatprep.subr.mxu0 0.0
    %967 = vmatpush1.msra.mxu0 0.0
    %968 = vmatprep.mubr.f32.mxu0 0.0
    %v969 = vand.u32 %v692, 4294901760
    %v970 = vsub.f32 %v692, %v969
    %971 = vmatmul.mubr.f32.gmra.mrb[0].mxu0 %v970
    %v972 = vpop.f32.mrb[0].mxu0
    %v973 = vadd.f32 %v885, %v972
    %v974 = vpop.f32.mrb[0].mxu0
    %975 = vdwg.mxu0
    %976 = vmatprep.subr.mxu0 0.0
    %v977 = vand.u32 %v28, 4294901760
    %978 = vmatpush1.msra.mxu0 %v977
    %979 = vmatprep.subr.mxu0 0.0
    %v980 = vand.u32 %v29, 4294901760
    %981 = vmatpush1.msra.mxu0 %v980
    %982 = vmatprep.subr.mxu0 0.0
    %v983 = vand.u32 %v30, 4294901760
    %984 = vmatpush1.msra.mxu0 %v983
    %985 = vmatprep.subr.mxu0 0.0
    %v986 = vand.u32 %v31, 4294901760
    %987 = vmatpush1.msra.mxu0 %v986
    %988 = vmatprep.subr.mxu0 0.0
    %v989 = vand.u32 %v32, 4294901760
    %990 = vmatpush1.msra.mxu0 %v989
    %991 = vmatprep.subr.mxu0 0.0
    %v992 = vand.u32 %v33, 4294901760
    %993 = vmatpush1.msra.mxu0 %v992
    %994 = vmatprep.subr.mxu0 0.0
    %v995 = vand.u32 %v34, 4294901760
    %996 = vmatpush1.msra.mxu0 %v995
    %997 = vmatprep.subr.mxu0 0.0
    %v998 = vand.u32 %v35, 4294901760
    %999 = vmatpush1.msra.mxu0 %v998
    %1000 = vmatprep.subr.mxu0 0.0
    %1001 = vmatpush1.msra.mxu0 0.0
    %1002 = vmatprep.subr.mxu0 0.0
    %1003 = vmatpush1.msra.mxu0 0.0
    %1004 = vmatprep.subr.mxu0 0.0
    %1005 = vmatpush1.msra.mxu0 0.0
    %1006 = vmatprep.subr.mxu0 0.0
    %1007 = vmatpush1.msra.mxu0 0.0
    %1008 = vmatprep.subr.mxu0 0.0
    %1009 = vmatpush1.msra.mxu0 0.0
    %1010 = vmatprep.subr.mxu0 0.0
    %1011 = vmatpush1.msra.mxu0 0.0
    %1012 = vmatprep.subr.mxu0 0.0
    %1013 = vmatpush1.msra.mxu0 0.0
    %1014 = vmatprep.subr.mxu0 0.0
    %1015 = vmatpush1.msra.mxu0 0.0
    %1016 = vmatprep.subr.mxu0 0.0
    %1017 = vmatpush1.msra.mxu0 0.0
    %1018 = vmatprep.subr.mxu0 0.0
    %1019 = vmatpush1.msra.mxu0 0.0
    %1020 = vmatprep.subr.mxu0 0.0
    %1021 = vmatpush1.msra.mxu0 0.0
    %1022 = vmatprep.subr.mxu0 0.0
    %1023 = vmatpush1.msra.mxu0 0.0
    %1024 = vmatprep.subr.mxu0 0.0
    %1025 = vmatpush1.msra.mxu0 0.0
    %1026 = vmatprep.subr.mxu0 0.0
    %1027 = vmatpush1.msra.mxu0 0.0
    %1028 = vmatprep.subr.mxu0 0.0
    %1029 = vmatpush1.msra.mxu0 0.0
    %1030 = vmatprep.subr.mxu0 0.0
    %1031 = vmatpush1.msra.mxu0 0.0
    %1032 = vmatprep.subr.mxu0 0.0
    %1033 = vmatpush1.msra.mxu0 0.0
    %1034 = vmatprep.subr.mxu0 0.0
    %1035 = vmatpush1.msra.mxu0 0.0
    %1036 = vmatprep.subr.mxu0 0.0
    %1037 = vmatpush1.msra.mxu0 0.0
    %1038 = vmatprep.subr.mxu0 0.0
    %1039 = vmatpush1.msra.mxu0 0.0
    %1040 = vmatprep.subr.mxu0 0.0
    %1041 = vmatpush1.msra.mxu0 0.0
    %1042 = vmatprep.subr.mxu0 0.0
    %1043 = vmatpush1.msra.mxu0 0.0
    %1044 = vmatprep.subr.mxu0 0.0
    %1045 = vmatpush1.msra.mxu0 0.0
    %1046 = vmatprep.subr.mxu0 0.0
    %1047 = vmatpush1.msra.mxu0 0.0
    %1048 = vmatprep.mubr.f32.mxu0 0.0
    %v1049 = vand.u32 %v692, 4294901760
    %v1050 = vsub.f32 %v692, %v1049
    %v1051 = vand.u32 %v1050, 4294901760
    %1052 = vmatmul.mubr.f32.gmra.mrb[0].mxu0 %v1051
    %v1053 = vpop.f32.mrb[0].mxu0
    %v1054 = vadd.f32 %v973, %v1053
    %v1055 = vpop.f32.mrb[0].mxu0
    %1056 = vdwg.mxu0
    %1057 = vmatprep.subr.mxu0 0.0
    %v1058 = vand.u32 %v28, 4294901760
    %v1059 = vsub.f32 %v28, %v1058
    %v1060 = vand.u32 %v1059, 4294901760
    %1061 = vmatpush1.msra.mxu0 %v1060
    %1062 = vmatprep.subr.mxu0 0.0
    %v1063 = vand.u32 %v29, 4294901760
    %v1064 = vsub.f32 %v29, %v1063
    %v1065 = vand.u32 %v1064, 4294901760
    %1066 = vmatpush1.msra.mxu0 %v1065
    %1067 = vmatprep.subr.mxu0 0.0
    %v1068 = vand.u32 %v30, 4294901760
    %v1069 = vsub.f32 %v30, %v1068
    %v1070 = vand.u32 %v1069, 4294901760
    %1071 = vmatpush1.msra.mxu0 %v1070
    %1072 = vmatprep.subr.mxu0 0.0
    %v1073 = vand.u32 %v31, 4294901760
    %v1074 = vsub.f32 %v31, %v1073
    %v1075 = vand.u32 %v1074, 4294901760
    %1076 = vmatpush1.msra.mxu0 %v1075
    %1077 = vmatprep.subr.mxu0 0.0
    %v1078 = vand.u32 %v32, 4294901760
    %v1079 = vsub.f32 %v32, %v1078
    %v1080 = vand.u32 %v1079, 4294901760
    %1081 = vmatpush1.msra.mxu0 %v1080
    %1082 = vmatprep.subr.mxu0 0.0
    %v1083 = vand.u32 %v33, 4294901760
    %v1084 = vsub.f32 %v33, %v1083
    %v1085 = vand.u32 %v1084, 4294901760
    %1086 = vmatpush1.msra.mxu0 %v1085
    %1087 = vmatprep.subr.mxu0 0.0
    %v1088 = vand.u32 %v34, 4294901760
    %v1089 = vsub.f32 %v34, %v1088
    %v1090 = vand.u32 %v1089, 4294901760
    %1091 = vmatpush1.msra.mxu0 %v1090
    %1092 = vmatprep.subr.mxu0 0.0
    %v1093 = vand.u32 %v35, 4294901760
    %v1094 = vsub.f32 %v35, %v1093
    %v1095 = vand.u32 %v1094, 4294901760
    %1096 = vmatpush1.msra.mxu0 %v1095
    %1097 = vmatprep.subr.mxu0 0.0
    %1098 = vmatpush1.msra.mxu0 0.0
    %1099 = vmatprep.subr.mxu0 0.0
    %1100 = vmatpush1.msra.mxu0 0.0
    %1101 = vmatprep.subr.mxu0 0.0
    %1102 = vmatpush1.msra.mxu0 0.0
    %1103 = vmatprep.subr.mxu0 0.0
    %1104 = vmatpush1.msra.mxu0 0.0
    %1105 = vmatprep.subr.mxu0 0.0
    %1106 = vmatpush1.msra.mxu0 0.0
    %1107 = vmatprep.subr.mxu0 0.0
    %1108 = vmatpush1.msra.mxu0 0.0
    %1109 = vmatprep.subr.mxu0 0.0
    %1110 = vmatpush1.msra.mxu0 0.0
    %1111 = vmatprep.subr.mxu0 0.0
    %1112 = vmatpush1.msra.mxu0 0.0
    %1113 = vmatprep.subr.mxu0 0.0
    %1114 = vmatpush1.msra.mxu0 0.0
    %1115 = vmatprep.subr.mxu0 0.0
    %1116 = vmatpush1.msra.mxu0 0.0
    %1117 = vmatprep.subr.mxu0 0.0
    %1118 = vmatpush1.msra.mxu0 0.0
    %1119 = vmatprep.subr.mxu0 0.0
    %1120 = vmatpush1.msra.mxu0 0.0
    %1121 = vmatprep.subr.mxu0 0.0
    %1122 = vmatpush1.msra.mxu0 0.0
    %1123 = vmatprep.subr.mxu0 0.0
    %1124 = vmatpush1.msra.mxu0 0.0
    %1125 = vmatprep.subr.mxu0 0.0
    %1126 = vmatpush1.msra.mxu0 0.0
    %1127 = vmatprep.subr.mxu0 0.0
    %1128 = vmatpush1.msra.mxu0 0.0
    %1129 = vmatprep.subr.mxu0 0.0
    %1130 = vmatpush1.msra.mxu0 0.0
    %1131 = vmatprep.subr.mxu0 0.0
    %1132 = vmatpush1.msra.mxu0 0.0
    %1133 = vmatprep.subr.mxu0 0.0
    %1134 = vmatpush1.msra.mxu0 0.0
    %1135 = vmatprep.subr.mxu0 0.0
    %1136 = vmatpush1.msra.mxu0 0.0
    %1137 = vmatprep.subr.mxu0 0.0
    %1138 = vmatpush1.msra.mxu0 0.0
    %1139 = vmatprep.subr.mxu0 0.0
    %1140 = vmatpush1.msra.mxu0 0.0
    %1141 = vmatprep.subr.mxu0 0.0
    %1142 = vmatpush1.msra.mxu0 0.0
    %1143 = vmatprep.subr.mxu0 0.0
    %1144 = vmatpush1.msra.mxu0 0.0
    %1145 = vmatprep.mubr.f32.mxu0 0.0
    %v1146 = vand.u32 %v692, 4294901760
    %1147 = vmatmul.mubr.f32.gmra.mrb[0].mxu0 %v1146
    %v1148 = vpop.f32.mrb[0].mxu0
    %v1149 = vadd.f32 %v1054, %v1148
    %v1150 = vpop.f32.mrb[0].mxu0
    %1151 = vdwg.mxu0
    %1152 = vmatprep.subr.mxu0 0.0
    %v1153 = vand.u32 %v28, 4294901760
    %1154 = vmatpush1.msra.mxu0 %v1153
    %1155 = vmatprep.subr.mxu0 0.0
    %v1156 = vand.u32 %v29, 4294901760
    %1157 = vmatpush1.msra.mxu0 %v1156
    %1158 = vmatprep.subr.mxu0 0.0
    %v1159 = vand.u32 %v30, 4294901760
    %1160 = vmatpush1.msra.mxu0 %v1159
    %1161 = vmatprep.subr.mxu0 0.0
    %v1162 = vand.u32 %v31, 4294901760
    %1163 = vmatpush1.msra.mxu0 %v1162
    %1164 = vmatprep.subr.mxu0 0.0
    %v1165 = vand.u32 %v32, 4294901760
    %1166 = vmatpush1.msra.mxu0 %v1165
    %1167 = vmatprep.subr.mxu0 0.0
    %v1168 = vand.u32 %v33, 4294901760
    %1169 = vmatpush1.msra.mxu0 %v1168
    %1170 = vmatprep.subr.mxu0 0.0
    %v1171 = vand.u32 %v34, 4294901760
    %1172 = vmatpush1.msra.mxu0 %v1171
    %1173 = vmatprep.subr.mxu0 0.0
    %v1174 = vand.u32 %v35, 4294901760
    %1175 = vmatpush1.msra.mxu0 %v1174
    %1176 = vmatprep.subr.mxu0 0.0
    %1177 = vmatpush1.msra.mxu0 0.0
    %1178 = vmatprep.subr.mxu0 0.0
    %1179 = vmatpush1.msra.mxu0 0.0
    %1180 = vmatprep.subr.mxu0 0.0
    %1181 = vmatpush1.msra.mxu0 0.0
    %1182 = vmatprep.subr.mxu0 0.0
    %1183 = vmatpush1.msra.mxu0 0.0
    %1184 = vmatprep.subr.mxu0 0.0
    %1185 = vmatpush1.msra.mxu0 0.0
    %1186 = vmatprep.subr.mxu0 0.0
    %1187 = vmatpush1.msra.mxu0 0.0
    %1188 = vmatprep.subr.mxu0 0.0
    %1189 = vmatpush1.msra.mxu0 0.0
    %1190 = vmatprep.subr.mxu0 0.0
    %1191 = vmatpush1.msra.mxu0 0.0
    %1192 = vmatprep.subr.mxu0 0.0
    %1193 = vmatpush1.msra.mxu0 0.0
    %1194 = vmatprep.subr.mxu0 0.0
    %1195 = vmatpush1.msra.mxu0 0.0
    %1196 = vmatprep.subr.mxu0 0.0
    %1197 = vmatpush1.msra.mxu0 0.0
    %1198 = vmatprep.subr.mxu0 0.0
    %1199 = vmatpush1.msra.mxu0 0.0
    %1200 = vmatprep.subr.mxu0 0.0
    %1201 = vmatpush1.msra.mxu0 0.0
    %1202 = vmatprep.subr.mxu0 0.0
    %1203 = vmatpush1.msra.mxu0 0.0
    %1204 = vmatprep.subr.mxu0 0.0
    %1205 = vmatpush1.msra.mxu0 0.0
    %1206 = vmatprep.subr.mxu0 0.0
    %1207 = vmatpush1.msra.mxu0 0.0
    %1208 = vmatprep.subr.mxu0 0.0
    %1209 = vmatpush1.msra.mxu0 0.0
    %1210 = vmatprep.subr.mxu0 0.0
    %1211 = vmatpush1.msra.mxu0 0.0
    %1212 = vmatprep.subr.mxu0 0.0
    %1213 = vmatpush1.msra.mxu0 0.0
    %1214 = vmatprep.subr.mxu0 0.0
    %1215 = vmatpush1.msra.mxu0 0.0
    %1216 = vmatprep.subr.mxu0 0.0
    %1217 = vmatpush1.msra.mxu0 0.0
    %1218 = vmatprep.subr.mxu0 0.0
    %1219 = vmatpush1.msra.mxu0 0.0
    %1220 = vmatprep.subr.mxu0 0.0
    %1221 = vmatpush1.msra.mxu0 0.0
    %1222 = vmatprep.subr.mxu0 0.0
    %1223 = vmatpush1.msra.mxu0 0.0
    %1224 = vmatprep.mubr.f32.mxu0 0.0
    %v1225 = vand.u32 %v692, 4294901760
    %1226 = vmatmul.mubr.f32.gmra.mrb[0].mxu0 %v1225
    %v1227 = vpop.f32.mrb[0].mxu0
    %v1228 = vadd.f32 %v1149, %v1227
    %v1229 = vpop.f32.mrb[0].mxu0
    %1230 = vdwg.mxu0
    %v1231 = vmax.f32 %v1228, 0.0
    %v1233 = vsel %vm690, %v1231, 0
    %1235 = vmatprep.subr.mxu0 0.0
    %v1236 = vand.u32 %v36, 4294901760
    %1237 = vmatpush1.msra.mxu0 %v1236
    %1238 = vmatprep.subr.mxu0 0.0
    %v1239 = vand.u32 %v37, 4294901760
    %1240 = vmatpush1.msra.mxu0 %v1239
    %1241 = vmatprep.subr.mxu0 0.0
    %v1242 = vand.u32 %v38, 4294901760
    %1243 = vmatpush1.msra.mxu0 %v1242
    %1244 = vmatprep.subr.mxu0 0.0
    %v1245 = vand.u32 %v39, 4294901760
    %1246 = vmatpush1.msra.mxu0 %v1245
    %1247 = vmatprep.subr.mxu0 0.0
    %v1248 = vand.u32 %v40, 4294901760
    %1249 = vmatpush1.msra.mxu0 %v1248
    %1250 = vmatprep.subr.mxu0 0.0
    %v1251 = vand.u32 %v41, 4294901760
    %1252 = vmatpush1.msra.mxu0 %v1251
    %1253 = vmatprep.subr.mxu0 0.0
    %v1254 = vand.u32 %v42, 4294901760
    %1255 = vmatpush1.msra.mxu0 %v1254
    %1256 = vmatprep.subr.mxu0 0.0
    %v1257 = vand.u32 %v43, 4294901760
    %1258 = vmatpush1.msra.mxu0 %v1257
    %1259 = vmatprep.subr.mxu0 0.0
    %1260 = vmatpush1.msra.mxu0 0.0
    %1261 = vmatprep.subr.mxu0 0.0
    %1262 = vmatpush1.msra.mxu0 0.0
    %1263 = vmatprep.subr.mxu0 0.0
    %1264 = vmatpush1.msra.mxu0 0.0
    %1265 = vmatprep.subr.mxu0 0.0
    %1266 = vmatpush1.msra.mxu0 0.0
    %1267 = vmatprep.subr.mxu0 0.0
    %1268 = vmatpush1.msra.mxu0 0.0
    %1269 = vmatprep.subr.mxu0 0.0
    %1270 = vmatpush1.msra.mxu0 0.0
    %1271 = vmatprep.subr.mxu0 0.0
    %1272 = vmatpush1.msra.mxu0 0.0
    %1273 = vmatprep.subr.mxu0 0.0
    %1274 = vmatpush1.msra.mxu0 0.0
    %1275 = vmatprep.subr.mxu0 0.0
    %1276 = vmatpush1.msra.mxu0 0.0
    %1277 = vmatprep.subr.mxu0 0.0
    %1278 = vmatpush1.msra.mxu0 0.0
    %1279 = vmatprep.subr.mxu0 0.0
    %1280 = vmatpush1.msra.mxu0 0.0
    %1281 = vmatprep.subr.mxu0 0.0
    %1282 = vmatpush1.msra.mxu0 0.0
    %1283 = vmatprep.subr.mxu0 0.0
    %1284 = vmatpush1.msra.mxu0 0.0
    %1285 = vmatprep.subr.mxu0 0.0
    %1286 = vmatpush1.msra.mxu0 0.0
    %1287 = vmatprep.subr.mxu0 0.0
    %1288 = vmatpush1.msra.mxu0 0.0
    %1289 = vmatprep.subr.mxu0 0.0
    %1290 = vmatpush1.msra.mxu0 0.0
    %1291 = vmatprep.subr.mxu0 0.0
    %1292 = vmatpush1.msra.mxu0 0.0
    %1293 = vmatprep.subr.mxu0 0.0
    %1294 = vmatpush1.msra.mxu0 0.0
    %1295 = vmatprep.subr.mxu0 0.0
    %1296 = vmatpush1.msra.mxu0 0.0
    %1297 = vmatprep.subr.mxu0 0.0
    %1298 = vmatpush1.msra.mxu0 0.0
    %1299 = vmatprep.subr.mxu0 0.0
    %1300 = vmatpush1.msra.mxu0 0.0
    %1301 = vmatprep.subr.mxu0 0.0
    %1302 = vmatpush1.msra.mxu0 0.0
    %1303 = vmatprep.subr.mxu0 0.0
    %1304 = vmatpush1.msra.mxu0 0.0
    %1305 = vmatprep.subr.mxu0 0.0
    %1306 = vmatpush1.msra.mxu0 0.0
    %1307 = vmatprep.mubr.f32.mxu0 0.0
    %v1308 = vand.u32 %v1233, 4294901760
    %v1309 = vsub.f32 %v1233, %v1308
    %v1310 = vand.u32 %v1309, 4294901760
    %v1311 = vsub.f32 %v1309, %v1310
    %v1312 = vand.u32 %v1311, 4294901760
    %1313 = vmatmul.mubr.f32.gmra.mrb[0].mxu0 %v1312
    %v1314 = vpop.f32.mrb[0].mxu0
    %v1315 = vadd.f32 %v46, %v1314
    %v1316 = vpop.f32.mrb[0].mxu0
    %1317 = vdwg.mxu0
    %1318 = vmatprep.subr.mxu0 0.0
    %v1319 = vand.u32 %v36, 4294901760
    %v1320 = vsub.f32 %v36, %v1319
    %v1321 = vand.u32 %v1320, 4294901760
    %v1322 = vsub.f32 %v1320, %v1321
    %v1323 = vand.u32 %v1322, 4294901760
    %1324 = vmatpush1.msra.mxu0 %v1323
    %1325 = vmatprep.subr.mxu0 0.0
    %v1326 = vand.u32 %v37, 4294901760
    %v1327 = vsub.f32 %v37, %v1326
    %v1328 = vand.u32 %v1327, 4294901760
    %v1329 = vsub.f32 %v1327, %v1328
    %v1330 = vand.u32 %v1329, 4294901760
    %1331 = vmatpush1.msra.mxu0 %v1330
    %1332 = vmatprep.subr.mxu0 0.0
    %v1333 = vand.u32 %v38, 4294901760
    %v1334 = vsub.f32 %v38, %v1333
    %v1335 = vand.u32 %v1334, 4294901760
    %v1336 = vsub.f32 %v1334, %v1335
    %v1337 = vand.u32 %v1336, 4294901760
    %1338 = vmatpush1.msra.mxu0 %v1337
    %1339 = vmatprep.subr.mxu0 0.0
    %v1340 = vand.u32 %v39, 4294901760
    %v1341 = vsub.f32 %v39, %v1340
    %v1342 = vand.u32 %v1341, 4294901760
    %v1343 = vsub.f32 %v1341, %v1342
    %v1344 = vand.u32 %v1343, 4294901760
    %1345 = vmatpush1.msra.mxu0 %v1344
    %1346 = vmatprep.subr.mxu0 0.0
    %v1347 = vand.u32 %v40, 4294901760
    %v1348 = vsub.f32 %v40, %v1347
    %v1349 = vand.u32 %v1348, 4294901760
    %v1350 = vsub.f32 %v1348, %v1349
    %v1351 = vand.u32 %v1350, 4294901760
    %1352 = vmatpush1.msra.mxu0 %v1351
    %1353 = vmatprep.subr.mxu0 0.0
    %v1354 = vand.u32 %v41, 4294901760
    %v1355 = vsub.f32 %v41, %v1354
    %v1356 = vand.u32 %v1355, 4294901760
    %v1357 = vsub.f32 %v1355, %v1356
    %v1358 = vand.u32 %v1357, 4294901760
    %1359 = vmatpush1.msra.mxu0 %v1358
    %1360 = vmatprep.subr.mxu0 0.0
    %v1361 = vand.u32 %v42, 4294901760
    %v1362 = vsub.f32 %v42, %v1361
    %v1363 = vand.u32 %v1362, 4294901760
    %v1364 = vsub.f32 %v1362, %v1363
    %v1365 = vand.u32 %v1364, 4294901760
    %1366 = vmatpush1.msra.mxu0 %v1365
    %1367 = vmatprep.subr.mxu0 0.0
    %v1368 = vand.u32 %v43, 4294901760
    %v1369 = vsub.f32 %v43, %v1368
    %v1370 = vand.u32 %v1369, 4294901760
    %v1371 = vsub.f32 %v1369, %v1370
    %v1372 = vand.u32 %v1371, 4294901760
    %1373 = vmatpush1.msra.mxu0 %v1372
    %1374 = vmatprep.subr.mxu0 0.0
    %1375 = vmatpush1.msra.mxu0 0.0
    %1376 = vmatprep.subr.mxu0 0.0
    %1377 = vmatpush1.msra.mxu0 0.0
    %1378 = vmatprep.subr.mxu0 0.0
    %1379 = vmatpush1.msra.mxu0 0.0
    %1380 = vmatprep.subr.mxu0 0.0
    %1381 = vmatpush1.msra.mxu0 0.0
    %1382 = vmatprep.subr.mxu0 0.0
    %1383 = vmatpush1.msra.mxu0 0.0
    %1384 = vmatprep.subr.mxu0 0.0
    %1385 = vmatpush1.msra.mxu0 0.0
    %1386 = vmatprep.subr.mxu0 0.0
    %1387 = vmatpush1.msra.mxu0 0.0
    %1388 = vmatprep.subr.mxu0 0.0
    %1389 = vmatpush1.msra.mxu0 0.0
    %1390 = vmatprep.subr.mxu0 0.0
    %1391 = vmatpush1.msra.mxu0 0.0
    %1392 = vmatprep.subr.mxu0 0.0
    %1393 = vmatpush1.msra.mxu0 0.0
    %1394 = vmatprep.subr.mxu0 0.0
    %1395 = vmatpush1.msra.mxu0 0.0
    %1396 = vmatprep.subr.mxu0 0.0
    %1397 = vmatpush1.msra.mxu0 0.0
    %1398 = vmatprep.subr.mxu0 0.0
    %1399 = vmatpush1.msra.mxu0 0.0
    %1400 = vmatprep.subr.mxu0 0.0
    %1401 = vmatpush1.msra.mxu0 0.0
    %1402 = vmatprep.subr.mxu0 0.0
    %1403 = vmatpush1.msra.mxu0 0.0
    %1404 = vmatprep.subr.mxu0 0.0
    %1405 = vmatpush1.msra.mxu0 0.0
    %1406 = vmatprep.subr.mxu0 0.0
    %1407 = vmatpush1.msra.mxu0 0.0
    %1408 = vmatprep.subr.mxu0 0.0
    %1409 = vmatpush1.msra.mxu0 0.0
    %1410 = vmatprep.subr.mxu0 0.0
    %1411 = vmatpush1.msra.mxu0 0.0
    %1412 = vmatprep.subr.mxu0 0.0
    %1413 = vmatpush1.msra.mxu0 0.0
    %1414 = vmatprep.subr.mxu0 0.0
    %1415 = vmatpush1.msra.mxu0 0.0
    %1416 = vmatprep.subr.mxu0 0.0
    %1417 = vmatpush1.msra.mxu0 0.0
    %1418 = vmatprep.subr.mxu0 0.0
    %1419 = vmatpush1.msra.mxu0 0.0
    %1420 = vmatprep.subr.mxu0 0.0
    %1421 = vmatpush1.msra.mxu0 0.0
    %1422 = vmatprep.mubr.f32.mxu0 0.0
    %v1423 = vand.u32 %v1233, 4294901760
    %1424 = vmatmul.mubr.f32.gmra.mrb[0].mxu0 %v1423
    %v1425 = vpop.f32.mrb[0].mxu0
    %v1426 = vadd.f32 %v1315, %v1425
    %v1427 = vpop.f32.mrb[0].mxu0
    %1428 = vdwg.mxu0
    %1429 = vmatprep.subr.mxu0 0.0
    %v1430 = vand.u32 %v36, 4294901760
    %v1431 = vsub.f32 %v36, %v1430
    %1432 = vmatpush1.msra.mxu0 %v1431
    %1433 = vmatprep.subr.mxu0 0.0
    %v1434 = vand.u32 %v37, 4294901760
    %v1435 = vsub.f32 %v37, %v1434
    %1436 = vmatpush1.msra.mxu0 %v1435
    %1437 = vmatprep.subr.mxu0 0.0
    %v1438 = vand.u32 %v38, 4294901760
    %v1439 = vsub.f32 %v38, %v1438
    %1440 = vmatpush1.msra.mxu0 %v1439
    %1441 = vmatprep.subr.mxu0 0.0
    %v1442 = vand.u32 %v39, 4294901760
    %v1443 = vsub.f32 %v39, %v1442
    %1444 = vmatpush1.msra.mxu0 %v1443
    %1445 = vmatprep.subr.mxu0 0.0
    %v1446 = vand.u32 %v40, 4294901760
    %v1447 = vsub.f32 %v40, %v1446
    %1448 = vmatpush1.msra.mxu0 %v1447
    %1449 = vmatprep.subr.mxu0 0.0
    %v1450 = vand.u32 %v41, 4294901760
    %v1451 = vsub.f32 %v41, %v1450
    %1452 = vmatpush1.msra.mxu0 %v1451
    %1453 = vmatprep.subr.mxu0 0.0
    %v1454 = vand.u32 %v42, 4294901760
    %v1455 = vsub.f32 %v42, %v1454
    %1456 = vmatpush1.msra.mxu0 %v1455
    %1457 = vmatprep.subr.mxu0 0.0
    %v1458 = vand.u32 %v43, 4294901760
    %v1459 = vsub.f32 %v43, %v1458
    %1460 = vmatpush1.msra.mxu0 %v1459
    %1461 = vmatprep.subr.mxu0 0.0
    %1462 = vmatpush1.msra.mxu0 0.0
    %1463 = vmatprep.subr.mxu0 0.0
    %1464 = vmatpush1.msra.mxu0 0.0
    %1465 = vmatprep.subr.mxu0 0.0
    %1466 = vmatpush1.msra.mxu0 0.0
    %1467 = vmatprep.subr.mxu0 0.0
    %1468 = vmatpush1.msra.mxu0 0.0
    %1469 = vmatprep.subr.mxu0 0.0
    %1470 = vmatpush1.msra.mxu0 0.0
    %1471 = vmatprep.subr.mxu0 0.0
    %1472 = vmatpush1.msra.mxu0 0.0
    %1473 = vmatprep.subr.mxu0 0.0
    %1474 = vmatpush1.msra.mxu0 0.0
    %1475 = vmatprep.subr.mxu0 0.0
    %1476 = vmatpush1.msra.mxu0 0.0
    %1477 = vmatprep.subr.mxu0 0.0
    %1478 = vmatpush1.msra.mxu0 0.0
    %1479 = vmatprep.subr.mxu0 0.0
    %1480 = vmatpush1.msra.mxu0 0.0
    %1481 = vmatprep.subr.mxu0 0.0
    %1482 = vmatpush1.msra.mxu0 0.0
    %1483 = vmatprep.subr.mxu0 0.0
    %1484 = vmatpush1.msra.mxu0 0.0
    %1485 = vmatprep.subr.mxu0 0.0
    %1486 = vmatpush1.msra.mxu0 0.0
    %1487 = vmatprep.subr.mxu0 0.0
    %1488 = vmatpush1.msra.mxu0 0.0
    %1489 = vmatprep.subr.mxu0 0.0
    %1490 = vmatpush1.msra.mxu0 0.0
    %1491 = vmatprep.subr.mxu0 0.0
    %1492 = vmatpush1.msra.mxu0 0.0
    %1493 = vmatprep.subr.mxu0 0.0
    %1494 = vmatpush1.msra.mxu0 0.0
    %1495 = vmatprep.subr.mxu0 0.0
    %1496 = vmatpush1.msra.mxu0 0.0
    %1497 = vmatprep.subr.mxu0 0.0
    %1498 = vmatpush1.msra.mxu0 0.0
    %1499 = vmatprep.subr.mxu0 0.0
    %1500 = vmatpush1.msra.mxu0 0.0
    %1501 = vmatprep.subr.mxu0 0.0
    %1502 = vmatpush1.msra.mxu0 0.0
    %1503 = vmatprep.subr.mxu0 0.0
    %1504 = vmatpush1.msra.mxu0 0.0
    %1505 = vmatprep.subr.mxu0 0.0
    %1506 = vmatpush1.msra.mxu0 0.0
    %1507 = vmatprep.subr.mxu0 0.0
    %1508 = vmatpush1.msra.mxu0 0.0
    %1509 = vmatprep.mubr.f32.mxu0 0.0
    %v1510 = vand.u32 %v1233, 4294901760
    %v1511 = vsub.f32 %v1233, %v1510
    %1512 = vmatmul.mubr.f32.gmra.mrb[0].mxu0 %v1511
    %v1513 = vpop.f32.mrb[0].mxu0
    %v1514 = vadd.f32 %v1426, %v1513
    %v1515 = vpop.f32.mrb[0].mxu0
    %1516 = vdwg.mxu0
    %1517 = vmatprep.subr.mxu0 0.0
    %v1518 = vand.u32 %v36, 4294901760
    %1519 = vmatpush1.msra.mxu0 %v1518
    %1520 = vmatprep.subr.mxu0 0.0
    %v1521 = vand.u32 %v37, 4294901760
    %1522 = vmatpush1.msra.mxu0 %v1521
    %1523 = vmatprep.subr.mxu0 0.0
    %v1524 = vand.u32 %v38, 4294901760
    %1525 = vmatpush1.msra.mxu0 %v1524
    %1526 = vmatprep.subr.mxu0 0.0
    %v1527 = vand.u32 %v39, 4294901760
    %1528 = vmatpush1.msra.mxu0 %v1527
    %1529 = vmatprep.subr.mxu0 0.0
    %v1530 = vand.u32 %v40, 4294901760
    %1531 = vmatpush1.msra.mxu0 %v1530
    %1532 = vmatprep.subr.mxu0 0.0
    %v1533 = vand.u32 %v41, 4294901760
    %1534 = vmatpush1.msra.mxu0 %v1533
    %1535 = vmatprep.subr.mxu0 0.0
    %v1536 = vand.u32 %v42, 4294901760
    %1537 = vmatpush1.msra.mxu0 %v1536
    %1538 = vmatprep.subr.mxu0 0.0
    %v1539 = vand.u32 %v43, 4294901760
    %1540 = vmatpush1.msra.mxu0 %v1539
    %1541 = vmatprep.subr.mxu0 0.0
    %1542 = vmatpush1.msra.mxu0 0.0
    %1543 = vmatprep.subr.mxu0 0.0
    %1544 = vmatpush1.msra.mxu0 0.0
    %1545 = vmatprep.subr.mxu0 0.0
    %1546 = vmatpush1.msra.mxu0 0.0
    %1547 = vmatprep.subr.mxu0 0.0
    %1548 = vmatpush1.msra.mxu0 0.0
    %1549 = vmatprep.subr.mxu0 0.0
    %1550 = vmatpush1.msra.mxu0 0.0
    %1551 = vmatprep.subr.mxu0 0.0
    %1552 = vmatpush1.msra.mxu0 0.0
    %1553 = vmatprep.subr.mxu0 0.0
    %1554 = vmatpush1.msra.mxu0 0.0
    %1555 = vmatprep.subr.mxu0 0.0
    %1556 = vmatpush1.msra.mxu0 0.0
    %1557 = vmatprep.subr.mxu0 0.0
    %1558 = vmatpush1.msra.mxu0 0.0
    %1559 = vmatprep.subr.mxu0 0.0
    %1560 = vmatpush1.msra.mxu0 0.0
    %1561 = vmatprep.subr.mxu0 0.0
    %1562 = vmatpush1.msra.mxu0 0.0
    %1563 = vmatprep.subr.mxu0 0.0
    %1564 = vmatpush1.msra.mxu0 0.0
    %1565 = vmatprep.subr.mxu0 0.0
    %1566 = vmatpush1.msra.mxu0 0.0
    %1567 = vmatprep.subr.mxu0 0.0
    %1568 = vmatpush1.msra.mxu0 0.0
    %1569 = vmatprep.subr.mxu0 0.0
    %1570 = vmatpush1.msra.mxu0 0.0
    %1571 = vmatprep.subr.mxu0 0.0
    %1572 = vmatpush1.msra.mxu0 0.0
    %1573 = vmatprep.subr.mxu0 0.0
    %1574 = vmatpush1.msra.mxu0 0.0
    %1575 = vmatprep.subr.mxu0 0.0
    %1576 = vmatpush1.msra.mxu0 0.0
    %1577 = vmatprep.subr.mxu0 0.0
    %1578 = vmatpush1.msra.mxu0 0.0
    %1579 = vmatprep.subr.mxu0 0.0
    %1580 = vmatpush1.msra.mxu0 0.0
    %1581 = vmatprep.subr.mxu0 0.0
    %1582 = vmatpush1.msra.mxu0 0.0
    %1583 = vmatprep.subr.mxu0 0.0
    %1584 = vmatpush1.msra.mxu0 0.0
    %1585 = vmatprep.subr.mxu0 0.0
    %1586 = vmatpush1.msra.mxu0 0.0
    %1587 = vmatprep.subr.mxu0 0.0
    %1588 = vmatpush1.msra.mxu0 0.0
    %1589 = vmatprep.mubr.f32.mxu0 0.0
    %v1590 = vand.u32 %v1233, 4294901760
    %v1591 = vsub.f32 %v1233, %v1590
    %v1592 = vand.u32 %v1591, 4294901760
    %1593 = vmatmul.mubr.f32.gmra.mrb[0].mxu0 %v1592
    %v1594 = vpop.f32.mrb[0].mxu0
    %v1595 = vadd.f32 %v1514, %v1594
    %v1596 = vpop.f32.mrb[0].mxu0
    %1597 = vdwg.mxu0
    %1598 = vmatprep.subr.mxu0 0.0
    %v1599 = vand.u32 %v36, 4294901760
    %v1600 = vsub.f32 %v36, %v1599
    %v1601 = vand.u32 %v1600, 4294901760
    %1602 = vmatpush1.msra.mxu0 %v1601
    %1603 = vmatprep.subr.mxu0 0.0
    %v1604 = vand.u32 %v37, 4294901760
    %v1605 = vsub.f32 %v37, %v1604
    %v1606 = vand.u32 %v1605, 4294901760
    %1607 = vmatpush1.msra.mxu0 %v1606
    %1608 = vmatprep.subr.mxu0 0.0
    %v1609 = vand.u32 %v38, 4294901760
    %v1610 = vsub.f32 %v38, %v1609
    %v1611 = vand.u32 %v1610, 4294901760
    %1612 = vmatpush1.msra.mxu0 %v1611
    %1613 = vmatprep.subr.mxu0 0.0
    %v1614 = vand.u32 %v39, 4294901760
    %v1615 = vsub.f32 %v39, %v1614
    %v1616 = vand.u32 %v1615, 4294901760
    %1617 = vmatpush1.msra.mxu0 %v1616
    %1618 = vmatprep.subr.mxu0 0.0
    %v1619 = vand.u32 %v40, 4294901760
    %v1620 = vsub.f32 %v40, %v1619
    %v1621 = vand.u32 %v1620, 4294901760
    %1622 = vmatpush1.msra.mxu0 %v1621
    %1623 = vmatprep.subr.mxu0 0.0
    %v1624 = vand.u32 %v41, 4294901760
    %v1625 = vsub.f32 %v41, %v1624
    %v1626 = vand.u32 %v1625, 4294901760
    %1627 = vmatpush1.msra.mxu0 %v1626
    %1628 = vmatprep.subr.mxu0 0.0
    %v1629 = vand.u32 %v42, 4294901760
    %v1630 = vsub.f32 %v42, %v1629
    %v1631 = vand.u32 %v1630, 4294901760
    %1632 = vmatpush1.msra.mxu0 %v1631
    %1633 = vmatprep.subr.mxu0 0.0
    %v1634 = vand.u32 %v43, 4294901760
    %v1635 = vsub.f32 %v43, %v1634
    %v1636 = vand.u32 %v1635, 4294901760
    %1637 = vmatpush1.msra.mxu0 %v1636
    %1638 = vmatprep.subr.mxu0 0.0
    %1639 = vmatpush1.msra.mxu0 0.0
    %1640 = vmatprep.subr.mxu0 0.0
    %1641 = vmatpush1.msra.mxu0 0.0
    %1642 = vmatprep.subr.mxu0 0.0
    %1643 = vmatpush1.msra.mxu0 0.0
    %1644 = vmatprep.subr.mxu0 0.0
    %1645 = vmatpush1.msra.mxu0 0.0
    %1646 = vmatprep.subr.mxu0 0.0
    %1647 = vmatpush1.msra.mxu0 0.0
    %1648 = vmatprep.subr.mxu0 0.0
    %1649 = vmatpush1.msra.mxu0 0.0
    %1650 = vmatprep.subr.mxu0 0.0
    %1651 = vmatpush1.msra.mxu0 0.0
    %1652 = vmatprep.subr.mxu0 0.0
    %1653 = vmatpush1.msra.mxu0 0.0
    %1654 = vmatprep.subr.mxu0 0.0
    %1655 = vmatpush1.msra.mxu0 0.0
    %1656 = vmatprep.subr.mxu0 0.0
    %1657 = vmatpush1.msra.mxu0 0.0
    %1658 = vmatprep.subr.mxu0 0.0
    %1659 = vmatpush1.msra.mxu0 0.0
    %1660 = vmatprep.subr.mxu0 0.0
    %1661 = vmatpush1.msra.mxu0 0.0
    %1662 = vmatprep.subr.mxu0 0.0
    %1663 = vmatpush1.msra.mxu0 0.0
    %1664 = vmatprep.subr.mxu0 0.0
    %1665 = vmatpush1.msra.mxu0 0.0
    %1666 = vmatprep.subr.mxu0 0.0
    %1667 = vmatpush1.msra.mxu0 0.0
    %1668 = vmatprep.subr.mxu0 0.0
    %1669 = vmatpush1.msra.mxu0 0.0
    %1670 = vmatprep.subr.mxu0 0.0
    %1671 = vmatpush1.msra.mxu0 0.0
    %1672 = vmatprep.subr.mxu0 0.0
    %1673 = vmatpush1.msra.mxu0 0.0
    %1674 = vmatprep.subr.mxu0 0.0
    %1675 = vmatpush1.msra.mxu0 0.0
    %1676 = vmatprep.subr.mxu0 0.0
    %1677 = vmatpush1.msra.mxu0 0.0
    %1678 = vmatprep.subr.mxu0 0.0
    %1679 = vmatpush1.msra.mxu0 0.0
    %1680 = vmatprep.subr.mxu0 0.0
    %1681 = vmatpush1.msra.mxu0 0.0
    %1682 = vmatprep.subr.mxu0 0.0
    %1683 = vmatpush1.msra.mxu0 0.0
    %1684 = vmatprep.subr.mxu0 0.0
    %1685 = vmatpush1.msra.mxu0 0.0
    %1686 = vmatprep.mubr.f32.mxu0 0.0
    %v1687 = vand.u32 %v1233, 4294901760
    %1688 = vmatmul.mubr.f32.gmra.mrb[0].mxu0 %v1687
    %v1689 = vpop.f32.mrb[0].mxu0
    %v1690 = vadd.f32 %v1595, %v1689
    %v1691 = vpop.f32.mrb[0].mxu0
    %1692 = vdwg.mxu0
    %1693 = vmatprep.subr.mxu0 0.0
    %v1694 = vand.u32 %v36, 4294901760
    %1695 = vmatpush1.msra.mxu0 %v1694
    %1696 = vmatprep.subr.mxu0 0.0
    %v1697 = vand.u32 %v37, 4294901760
    %1698 = vmatpush1.msra.mxu0 %v1697
    %1699 = vmatprep.subr.mxu0 0.0
    %v1700 = vand.u32 %v38, 4294901760
    %1701 = vmatpush1.msra.mxu0 %v1700
    %1702 = vmatprep.subr.mxu0 0.0
    %v1703 = vand.u32 %v39, 4294901760
    %1704 = vmatpush1.msra.mxu0 %v1703
    %1705 = vmatprep.subr.mxu0 0.0
    %v1706 = vand.u32 %v40, 4294901760
    %1707 = vmatpush1.msra.mxu0 %v1706
    %1708 = vmatprep.subr.mxu0 0.0
    %v1709 = vand.u32 %v41, 4294901760
    %1710 = vmatpush1.msra.mxu0 %v1709
    %1711 = vmatprep.subr.mxu0 0.0
    %v1712 = vand.u32 %v42, 4294901760
    %1713 = vmatpush1.msra.mxu0 %v1712
    %1714 = vmatprep.subr.mxu0 0.0
    %v1715 = vand.u32 %v43, 4294901760
    %1716 = vmatpush1.msra.mxu0 %v1715
    %1717 = vmatprep.subr.mxu0 0.0
    %1718 = vmatpush1.msra.mxu0 0.0
    %1719 = vmatprep.subr.mxu0 0.0
    %1720 = vmatpush1.msra.mxu0 0.0
    %1721 = vmatprep.subr.mxu0 0.0
    %1722 = vmatpush1.msra.mxu0 0.0
    %1723 = vmatprep.subr.mxu0 0.0
    %1724 = vmatpush1.msra.mxu0 0.0
    %1725 = vmatprep.subr.mxu0 0.0
    %1726 = vmatpush1.msra.mxu0 0.0
    %1727 = vmatprep.subr.mxu0 0.0
    %1728 = vmatpush1.msra.mxu0 0.0
    %1729 = vmatprep.subr.mxu0 0.0
    %1730 = vmatpush1.msra.mxu0 0.0
    %1731 = vmatprep.subr.mxu0 0.0
    %1732 = vmatpush1.msra.mxu0 0.0
    %1733 = vmatprep.subr.mxu0 0.0
    %1734 = vmatpush1.msra.mxu0 0.0
    %1735 = vmatprep.subr.mxu0 0.0
    %1736 = vmatpush1.msra.mxu0 0.0
    %1737 = vmatprep.subr.mxu0 0.0
    %1738 = vmatpush1.msra.mxu0 0.0
    %1739 = vmatprep.subr.mxu0 0.0
    %1740 = vmatpush1.msra.mxu0 0.0
    %1741 = vmatprep.subr.mxu0 0.0
    %1742 = vmatpush1.msra.mxu0 0.0
    %1743 = vmatprep.subr.mxu0 0.0
    %1744 = vmatpush1.msra.mxu0 0.0
    %1745 = vmatprep.subr.mxu0 0.0
    %1746 = vmatpush1.msra.mxu0 0.0
    %1747 = vmatprep.subr.mxu0 0.0
    %1748 = vmatpush1.msra.mxu0 0.0
    %1749 = vmatprep.subr.mxu0 0.0
    %1750 = vmatpush1.msra.mxu0 0.0
    %1751 = vmatprep.subr.mxu0 0.0
    %1752 = vmatpush1.msra.mxu0 0.0
    %1753 = vmatprep.subr.mxu0 0.0
    %1754 = vmatpush1.msra.mxu0 0.0
    %1755 = vmatprep.subr.mxu0 0.0
    %1756 = vmatpush1.msra.mxu0 0.0
    %1757 = vmatprep.subr.mxu0 0.0
    %1758 = vmatpush1.msra.mxu0 0.0
    %1759 = vmatprep.subr.mxu0 0.0
    %1760 = vmatpush1.msra.mxu0 0.0
    %1761 = vmatprep.subr.mxu0 0.0
    %1762 = vmatpush1.msra.mxu0 0.0
    %1763 = vmatprep.subr.mxu0 0.0
    %1764 = vmatpush1.msra.mxu0 0.0
    %1765 = vmatprep.mubr.f32.mxu0 0.0
    %v1766 = vand.u32 %v1233, 4294901760
    %1767 = vmatmul.mubr.f32.gmra.mrb[0].mxu0 %v1766
    %v1768 = vpop.f32.mrb[0].mxu0
    %v1769 = vadd.f32 %v1690, %v1768
    %v1770 = vpop.f32.mrb[0].mxu0
    %1771 = vdwg.mxu0
    %vm1772 = vcmask 57344
    %1773 = vst.msk [vmem:[#allocation2] sm:$0x1] %vm1772, %v1769
    // Predicated region
    $region10: #{tpu_custom_call.1} parent=1 // pred_check
      _
    $region11: #{tpu_custom_call.1} parent=1 // pred_check_branch
      %1775 = sbr.rel (0) target = $region13
    $region12: #{tpu_custom_call.1} parent=1 // pred_region
      %s1777 = ssub.s32 16, 16
      %1778 = vsyncadd [#allocation3], %s1777
      %s1780 = sshll.u32 [#allocation2], 4
      %s1781 = int_to_ptr.vmem [resolvable:$true] %s1780
      %1783 = dma.vmem_to_hbm [thread:$0]  %s1781, 16, %s2, [#allocation3]
    $region13: #{tpu_custom_call.1} parent=1 // pred_fallthru
      _
    // Predicated region
    $region14: #{tpu_custom_call.1} parent=1 // pred_check
      _
    $region15: #{tpu_custom_call.1} parent=1 // pred_check_branch
      %1785 = sbr.rel (0) target = $region17
    $region16: #{tpu_custom_call.1} parent=1 // pred_region
      %1786 = dma.done [#allocation3], 16
    $region17: #{tpu_custom_call.1} parent=1 // pred_fallthru
      _
    %1787 = vsyncpa [#allocation3], 1

</llo_original>
